<compile_context>
chip_gen: v5e
topology: v5e:2x2
jax: 0.10.0
libtpu: 0.0.40
codegen_flags: <defaults>
</compile_context>

<pallas_src>
import math
from functools import partial

import jax
import jax.numpy as jnp
from jax.experimental import pallas as pl
from jax.experimental.pallas import tpu as pltpu


def _round_up(x, m):
    return (x + m - 1) // m * m


def _choose_heads_per_group(num_heads, head_dim, target_lanes=256):
    """Largest divisor G of num_heads with G*head_dim <= target_lanes."""
    # TODO(synk): make target_lanes generation-aware (128 on v5e's 128-wide MXU)
    # via pltpu.get_tpu_info(); 256 exactly fills the v6e/v7x MXU N dimension.
    best = 1
    for g in range(1, num_heads + 1):
        if num_heads % g == 0 and g * head_dim <= max(target_lanes, head_dim):
            best = g
    return best


# ---------------------------------------------------------------------------
# Fused kernel: per (batch, query-tile, head-group).
# ---------------------------------------------------------------------------
def _fused_attn_kernel(xq_ref, xf_ref, wq_ref, bq_ref, wkv_ref, bkv_ref,
                       wo_ref, bo_ref, *rest,
                       vis, seq_len, heads_per_group, head_dim, hidden,
                       compute_dtype):
    if vis:
        out_ref, probs_ref, acc_ref = rest
    else:
        out_ref, acc_ref = rest
        probs_ref = None

    hg = pl.program_id(2)
    G, d = heads_per_group, head_dim
    Gd = G * d
    tq = out_ref.shape[1]        # query-tile rows
    sk = xf_ref.shape[1]         # padded key rows (multiple of 128)

    # Init the fused output-projection accumulator with the output bias.
    @pl.when(hg == 0)
    def _init():
        acc_ref[...] = jnp.broadcast_to(
            bo_ref[...].astype(jnp.float32), (tq, hidden))

    xq = xq_ref[0]               # (Tq, H)
    xf = xf_ref[0]               # (Sk, H)
    if compute_dtype is not None and xq.dtype != compute_dtype:
        xq = xq.astype(compute_dtype)
        xf = xf.astype(compute_dtype)

    # Grid-resident, pre-cast weights for this head group (dynamic first-axis load).
    wq = wq_ref[hg]              # (H, Gd)    (1/sqrt(d) already folded in)
    wkv = wkv_ref[hg]            # (H, 2*Gd)
    wo = wo_ref[hg]              # (Gd, H)

    # Q on the query tile, fused K|V on the full (padded) sequence.
    q = jnp.dot(xq, wq, preferred_element_type=jnp.float32) \
        + bq_ref[hg].astype(jnp.float32)                      # (Tq, Gd) f32
    kv = jnp.dot(xf, wkv, preferred_element_type=jnp.float32) \
        + bkv_ref[hg].astype(jnp.float32)                     # (Sk, 2*Gd) f32
    k = kv[:, :Gd]
    v = kv[:, Gd:]
    if compute_dtype is not None:
        q = q.astype(compute_dtype)
        k = k.astype(compute_dtype)
        v = v.astype(compute_dtype)

    if sk != seq_len:
        key_valid = jax.lax.broadcasted_iota(jnp.int32, (tq, sk), 1) < seq_len
    else:
        key_valid = None

    ctx_parts = []
    for g in range(G):
        qg = q[:, g * d:(g + 1) * d]
        kg = k[:, g * d:(g + 1) * d]
        vg = v[:, g * d:(g + 1) * d]

        # q @ k^T by contracting last dims: no explicit transpose through the XLU.
        s = jax.lax.dot_general(
            qg, kg, (((1,), (1,)), ((), ())),
            preferred_element_type=jnp.float32)               # (Tq, Sk) f32
        if key_valid is not None:
            s = jnp.where(key_valid, s, -1e30)

        # Numerically stable softmax in f32; reciprocal on the EUP (approx).
        s = s - jnp.max(s, axis=-1, keepdims=True)
        e = jnp.exp(s)
        p = e * pl.reciprocal(jnp.sum(e, axis=-1, keepdims=True), approx=True)

        if probs_ref is not None:
            probs_ref[0, g] = p.astype(probs_ref.dtype)

        p_mm = p.astype(compute_dtype) if compute_dtype is not None else p
        ctx_parts.append(jnp.dot(p_mm, vg, preferred_element_type=jnp.float32))

    # One consolidated out-projection matmul per head-group: K = G*d (full MXU depth),
    # single f32 accumulate instead of G separate (Tq, H) adds.
    ctx = ctx_parts[0] if G == 1 else jnp.concatenate(ctx_parts, axis=-1)  # (Tq, Gd)
    if compute_dtype is not None:
        ctx = ctx.astype(compute_dtype)
    acc_ref[...] += jnp.dot(ctx, wo, preferred_element_type=jnp.float32)   # (Tq, H)

    @pl.when(hg == pl.num_programs(2) - 1)
    def _finalize():
        out_ref[0] = acc_ref[...].astype(out_ref.dtype)


# ---------------------------------------------------------------------------
# Weight packing (hoisted out of the per-call path — do this once at init).
# params use PyTorch Linear convention: W (out, in), b (out,).
# ---------------------------------------------------------------------------
def pack_attention_params(params, num_heads, heads_per_group=None,
                          matmul_dtype=None, target_lanes=256):
    H = params["Wq"].shape[0]
    assert H % num_heads == 0
    d = H // num_heads
    G = (heads_per_group if heads_per_group is not None
         else _choose_heads_per_group(num_heads, d, target_lanes))
    assert num_heads % G == 0
    NG = num_heads // G
    Gd = G * d
    scale = 1.0 / math.sqrt(d)

    if matmul_dtype is None or jnp.dtype(matmul_dtype) == jnp.dtype(jnp.float32):
        compute_dtype = None
        w_dtype = jnp.float32
    else:
        compute_dtype = jnp.dtype(matmul_dtype)
        w_dtype = compute_dtype

    def grp_w(W):   # (out, in) -> per head-group (NG, H_in, G*d)
        return jnp.transpose(W.T.reshape(H, NG, Gd), (1, 0, 2))

    def grp_b(b):
        return b.reshape(NG, 1, Gd)

    # Fold the 1/sqrt(d) score scale into the query projection (zero runtime cost).
    wq = (grp_w(params["Wq"]) * scale).astype(w_dtype)            # (NG, H, Gd)
    bq = (grp_b(params["bq"]) * scale).astype(jnp.float32)        # (NG, 1, Gd)
    wkv = jnp.concatenate([grp_w(params["Wk"]), grp_w(params["Wv"])],
                          axis=-1).astype(w_dtype)                # (NG, H, 2Gd)
    bkv = jnp.concatenate([grp_b(params["bk"]), grp_b(params["bv"])],
                          axis=-1).astype(jnp.float32)            # (NG, 1, 2Gd)
    wo = params["Wo"].T.reshape(NG, Gd, H).astype(w_dtype)        # (NG, Gd, H)
    bo = params["bo"].reshape(1, H).astype(jnp.float32)           # (1, H)

    return {"wq": wq, "bq": bq, "wkv": wkv, "bkv": bkv, "wo": wo, "bo": bo,
            "num_heads": num_heads, "heads_per_group": G, "head_dim": d,
            "hidden": H, "compute_dtype": compute_dtype}


def _vmem_limit_bytes(tq, sk, H, NG, Gd, G, x_itemsize, w_itemsize,
                      probs_itemsize, vis):
    dbl = 2  # Pallas double-buffers every BlockSpec operand
    b = 0
    b += dbl * tq * H * x_itemsize            # x query tile
    b += dbl * sk * H * x_itemsize            # x full (keys)
    b += dbl * NG * H * Gd * w_itemsize       # wq (grid-resident, all groups)
    b += dbl * NG * H * 2 * Gd * w_itemsize   # wkv
    b += dbl * NG * Gd * H * w_itemsize       # wo
    b += dbl * NG * 3 * Gd * 4                # bq + bkv (f32)
    b += dbl * H * 4                          # bo
    b += dbl * tq * H * x_itemsize            # out
    if vis:
        b += dbl * G * tq * sk * probs_itemsize
    b += tq * H * 4                           # f32 accumulator scratch
    # in-kernel temporaries: q/kv slabs, per-head scores/exp/probs, ctx slab
    b += tq * Gd * 4 + sk * 2 * Gd * 4 + 4 * tq * sk * 4 + tq * Gd * 4
    b += 4 * (1 << 20)                        # compiler-temporary headroom
    return int(min(max(b, 16 * (1 << 20)), 100 * (1 << 20)))


def attention_forward(x, packed, vis=True, block_q=None, probs_dtype=None):
    """x: [B, S, H]. Returns (attention_output [B,S,H], weights [B,nh,S,S] or None)."""
    B, S, H = x.shape
    assert H == packed["hidden"]
    NH = packed["num_heads"]
    G = packed["heads_per_group"]
    d = packed["head_dim"]
    NG = NH // G
    Gd = G * d
    compute_dtype = packed["compute_dtype"]

    # Key axis lane-aligned (128) so scores/probs stores are unmasked; query axis
    # only sublane-aligned (8 f32 / 16 for 16-bit matmul dtype).
    q_align = 16 if (compute_dtype is not None
                     and jnp.dtype(compute_dtype).itemsize == 2) else 8
    sq0 = _round_up(S, q_align)
    sk = _round_up(S, 128)
    if block_q is None:
        tq = sq0
    else:
        tq = _round_up(min(block_q, sq0), q_align)
    sq = _round_up(sq0, tq)
    nq = sq // tq

    rows = max(sq, sk)
    x_p = x if rows == S else jnp.pad(x, ((0, 0), (0, rows - S), (0, 0)))

    x_itemsize = jnp.dtype(x.dtype).itemsize
    w_itemsize = jnp.dtype(packed["wq"].dtype).itemsize
    p_dtype = jnp.dtype(probs_dtype) if probs_dtype is not None else jnp.dtype(x.dtype)
    p_itemsize = p_dtype.itemsize

    kernel = partial(_fused_attn_kernel, vis=vis, seq_len=S,
                     heads_per_group=G, head_dim=d, hidden=H,
                     compute_dtype=compute_dtype)

    in_specs = [
        pl.BlockSpec((1, tq, H), lambda b, qi, hg: (b, qi, 0)),        # x (query tile)
        pl.BlockSpec((1, sk, H), lambda b, qi, hg: (b, 0, 0)),         # x (keys/values)
        pl.BlockSpec((NG, H, Gd), lambda b, qi, hg: (0, 0, 0)),        # Wq  (resident)
        pl.BlockSpec((NG, 1, Gd), lambda b, qi, hg: (0, 0, 0)),        # bq  (resident)
        pl.BlockSpec((NG, H, 2 * Gd), lambda b, qi, hg: (0, 0, 0)),    # Wkv (resident)
        pl.BlockSpec((NG, 1, 2 * Gd), lambda b, qi, hg: (0, 0, 0)),    # bkv (resident)
        pl.BlockSpec((NG, Gd, H), lambda b, qi, hg: (0, 0, 0)),        # Wo  (resident)
        pl.BlockSpec((1, H), lambda b, qi, hg: (0, 0)),                # bo
    ]
    out_spec_o = pl.BlockSpec((1, tq, H), lambda b, qi, hg: (b, qi, 0))
    out_shape_o = jax.ShapeDtypeStruct((B, sq, H), x.dtype)

    if vis:
        out_shape = (out_shape_o,
                     jax.ShapeDtypeStruct((B, NH, sq, sk), p_dtype))
        out_specs = [out_spec_o,
                     pl.BlockSpec((1, G, tq, sk), lambda b, qi, hg: (b, hg, qi, 0))]
    else:
        out_shape = out_shape_o
        out_specs = out_spec_o

    flops = B * nq * NG * (2 * tq * H * Gd + 2 * sk * H * 2 * Gd
                           + 4 * tq * sk * Gd + 2 * tq * Gd * H)
    transcendentals = B * nq * NG * G * tq * sk
    bytes_accessed = ((B * nq * tq * H + B * sk * H) * x_itemsize
                      + (NG * H * 3 * Gd + NG * Gd * H) * w_itemsize
                      + NG * 3 * Gd * 4 + H * 4
                      + B * sq * H * x_itemsize
                      + (B * NH * sq * sk * p_itemsize if vis else 0))

    res = pl.pallas_call(
        kernel,
        out_shape=out_shape,
        grid_spec=pltpu.PrefetchScalarGridSpec(
            num_scalar_prefetch=0,
            grid=(B, nq, NG),
            in_specs=in_specs,
            out_specs=out_specs,
            scratch_shapes=[pltpu.VMEM((tq, H), jnp.float32)]),
        compiler_params=pltpu.CompilerParams(
            dimension_semantics=("parallel", "parallel", "arbitrary"),
            vmem_limit_bytes=_vmem_limit_bytes(tq, sk, H, NG, Gd, G,
                                               x_itemsize, w_itemsize,
                                               p_itemsize, vis)),
        cost_estimate=pl.CostEstimate(flops=int(flops),
                                      transcendentals=int(transcendentals),
                                      bytes_accessed=int(bytes_accessed)),
    )(x_p, x_p, packed["wq"], packed["bq"], packed["wkv"], packed["bkv"],
      packed["wo"], packed["bo"])

    if vis:
        out_p, probs_p = res
        weights = probs_p if (sq == S and sk == S) else probs_p[:, :, :S, :S]
    else:
        out_p = res
        weights = None
    out = out_p if sq == S else out_p[:, :S, :]
    return out, weights


# ---------------------------------------------------------------------------
# Pure-JAX reference mirroring the PyTorch forward (eval mode).
# ---------------------------------------------------------------------------
def _reference(x, params, num_heads):
    B, S, H = x.shape
    d = H // num_heads

    def lin(t, W, b):
        return t @ W.T + b

    q = lin(x, params["Wq"], params["bq"]).reshape(B, S, num_heads, d).transpose(0, 2, 1, 3)
    k = lin(x, params["Wk"], params["bk"]).reshape(B, S, num_heads, d).transpose(0, 2, 1, 3)
    v = lin(x, params["Wv"], params["bv"]).reshape(B, S, num_heads, d).transpose(0, 2, 1, 3)
    scores = jnp.einsum("bhqd,bhkd->bhqk", q, k) / math.sqrt(d)
    probs = jax.nn.softmax(scores, axis=-1)
    ctx = jnp.einsum("bhqk,bhkd->bhqd", probs, v).transpose(0, 2, 1, 3).reshape(B, S, H)
    out = lin(ctx, params["Wo"], params["bo"])
    return out, probs


if __name__ == "__main__":
    def make_params(key, H):
        ks = jax.random.split(key, 8)
        names = ["Wq", "bq", "Wk", "bk", "Wv", "bv", "Wo", "bo"]
        p = {}
        for i, n in enumerate(names):
            shape = (H, H) if n.startswith("W") else (H,)
            p[n] = jax.random.normal(ks[i], shape, jnp.float32) * 0.02
        return p

    root = jax.random.PRNGKey(0)
    k1, k2, k3, k4, k5, k6 = jax.random.split(root, 6)

    # --- Config 1: B=2, S=8, H=32, num_heads=4 ---
    B, S, H, NH = 2, 8, 32, 4
    params1 = make_params(k1, H)
    x1 = jax.random.normal(k2, (B, S, H), jnp.float32)
    packed1 = pack_attention_params(params1, NH)   # packed once, reused every call

    out1, w1 = attention_forward(x1, packed1, vis=True)
    out1 = jax.block_until_ready(out1)
    w1 = jax.block_until_ready(w1)
    out1_ref, w1_ref = _reference(x1, params1, NH)
    assert out1.shape == (B, S, H) and w1.shape == (B, NH, S, S)
    assert jnp.allclose(out1, out1_ref, atol=2e-3, rtol=2e-3)
    assert jnp.allclose(w1, w1_ref, atol=2e-3, rtol=2e-3)

    # vis=False: probs output is never declared -> no [B,nh,S,S] HBM writeback.
    out1b, w1b = attention_forward(x1, packed1, vis=False)
    out1b = jax.block_until_ready(out1b)
    assert w1b is None
    assert jnp.allclose(out1b, out1_ref, atol=2e-3, rtol=2e-3)

    # --- Config 2: S=13 exercises key padding/masking; heads_per_group=2 so the
    #     head-group accumulation (reduction) axis really runs multiple steps. ---
    B2, S2, H2, NH2 = 2, 13, 64, 8
    params2 = make_params(k3, H2)
    x2 = jax.random.normal(k4, (B2, S2, H2), jnp.float32)
    packed2 = pack_attention_params(params2, NH2, heads_per_group=2)
    out2, w2 = attention_forward(x2, packed2, vis=True)
    out2 = jax.block_until_ready(out2)
    w2 = jax.block_until_ready(w2)
    out2_ref, w2_ref = _reference(x2, params2, NH2)
    assert out2.shape == (B2, S2, H2) and w2.shape == (B2, NH2, S2, S2)
    assert jnp.allclose(out2, out2_ref, atol=2e-3, rtol=2e-3)
    assert jnp.allclose(w2, w2_ref, atol=2e-3, rtol=2e-3)

    # --- Config 3: query tiling (block_q) exercises the multi-query-tile grid axis. ---
    B3, S3, H3, NH3 = 1, 72, 64, 8
    params3 = make_params(k5, H3)
    x3 = jax.random.normal(k6, (B3, S3, H3), jnp.float32)
    packed3 = pack_attention_params(params3, NH3)
    out3, w3 = attention_forward(x3, packed3, vis=True, block_q=32)
    out3 = jax.block_until_ready(out3)
    w3 = jax.block_until_ready(w3)
    out3_ref, w3_ref = _reference(x3, params3, NH3)
    assert out3.shape == (B3, S3, H3) and w3.shape == (B3, NH3, S3, S3)
    assert jnp.allclose(out3, out3_ref, atol=2e-3, rtol=2e-3)
    assert jnp.allclose(w3, w3_ref, atol=2e-3, rtol=2e-3)

    # --- bf16 MXU path (weights pre-cast at pack time, f32 accumulation/softmax) ---
    packed1_bf16 = pack_attention_params(params1, NH, matmul_dtype=jnp.bfloat16)
    out4, _ = attention_forward(x1, packed1_bf16, vis=False)
    out4 = jax.block_until_ready(out4)
    assert bool(jnp.all(jnp.isfinite(out4)))
    assert jnp.allclose(out4, out1_ref, atol=1e-2, rtol=1e-1)

    # TODO(synk): attn_dropout / proj_dropout are identity in eval mode; training-mode
    # stochastic dropout (pltpu.prng_*) is not implemented.
    # TODO(synk): when block_q yields >1 query tiles, K/V projection is recomputed per
    # tile; a per-head-group KV VMEM cache would remove that redundancy if needed.
    print("KERNEL_OK")
</pallas_src>

<mosaic_0001>
module attributes {stable_mosaic.version = 11 : i64} {
  func.func @_fused_attn_kernel(%arg0: i32, %arg1: i32, %arg2: i32, %arg3: memref<1x8x32xf32, #tpu.memory_space<vmem>>, %arg4: memref<1x128x32xf32, #tpu.memory_space<vmem>>, %arg5: memref<1x32x32xf32, #tpu.memory_space<vmem>>, %arg6: memref<1x1x32xf32, #tpu.memory_space<vmem>>, %arg7: memref<1x32x64xf32, #tpu.memory_space<vmem>>, %arg8: memref<1x1x64xf32, #tpu.memory_space<vmem>>, %arg9: memref<1x32x32xf32, #tpu.memory_space<vmem>>, %arg10: memref<1x32xf32, #tpu.memory_space<vmem>>, %arg11: memref<1x8x32xf32, #tpu.memory_space<vmem>>, %arg12: memref<1x4x8x128xf32, #tpu.memory_space<vmem>>, %arg13: memref<8x32xf32, #tpu.memory_space<vmem>>) attributes {dimension_semantics = [#tpu.dimension_semantics<parallel>, #tpu.dimension_semantics<parallel>, #tpu.dimension_semantics<arbitrary>], iteration_bounds = array<i64: 2, 1, 1>, scalar_prefetch = 0 : i64, scratch_operands = 1 : i64, tpu.core_type = #tpu.core_type<tc>, window_params = [{transform_indices = @transform_0, window_bounds = array<i64: 1, 8, 32>}, {transform_indices = @transform_1, window_bounds = array<i64: 1, 128, 32>}, {pipeline_mode = #tpu.pipeline_mode<synchronous>, transform_indices = @transform_2, window_bounds = array<i64: 1, 32, 32>}, {pipeline_mode = #tpu.pipeline_mode<synchronous>, transform_indices = @transform_3, window_bounds = array<i64: 1, 1, 32>}, {pipeline_mode = #tpu.pipeline_mode<synchronous>, transform_indices = @transform_4, window_bounds = array<i64: 1, 32, 64>}, {pipeline_mode = #tpu.pipeline_mode<synchronous>, transform_indices = @transform_5, window_bounds = array<i64: 1, 1, 64>}, {pipeline_mode = #tpu.pipeline_mode<synchronous>, transform_indices = @transform_6, window_bounds = array<i64: 1, 32, 32>}, {pipeline_mode = #tpu.pipeline_mode<synchronous>, transform_indices = @transform_7, window_bounds = array<i64: 1, 32>}, {transform_indices = @transform_8, window_bounds = array<i64: 1, 8, 32>}, {transform_indices = @transform_9, window_bounds = array<i64: 1, 4, 8, 128>}]} {
    %c0_i32 = arith.constant 0 : i32
    %0 = arith.cmpi eq, %arg2, %c0_i32 : i32
    %1 = arith.extui %0 : i1 to i32
    %c0_i32_0 = arith.constant 0 : i32
    %2 = arith.cmpi ne, %1, %c0_i32_0 : i32
    scf.if %2 {
      %c0_57 = arith.constant 0 : index
      %c0_58 = arith.constant 0 : index
      %121 = vector.load %arg10[%c0_57, %c0_58] : memref<1x32xf32, #tpu.memory_space<vmem>>, vector<1x32xf32>
      %122 = vector.shape_cast %121 : vector<1x32xf32> to vector<1x32xf32>
      %123 = vector.broadcast %122 : vector<1x32xf32> to vector<8x32xf32>
      %c0_59 = arith.constant 0 : index
      %c0_60 = arith.constant 0 : index
      %124 = vector.load %arg13[%c0_59, %c0_60] : memref<8x32xf32, #tpu.memory_space<vmem>>, vector<8x32xf32>
      tpu.vector_store %arg13[%c0_59, %c0_60], %123 {strides = array<i32>} : memref<8x32xf32, #tpu.memory_space<vmem>>, vector<8x32xf32>,
    } else {
    }
    %c0 = arith.constant 0 : index
    %c0_1 = arith.constant 0 : index
    %c0_2 = arith.constant 0 : index
    %3 = vector.load %arg3[%c0, %c0_1, %c0_2] : memref<1x8x32xf32, #tpu.memory_space<vmem>>, vector<1x8x32xf32>
    %4 = vector.shape_cast %3 : vector<1x8x32xf32> to vector<8x32xf32>
    %c0_3 = arith.constant 0 : index
    %c0_4 = arith.constant 0 : index
    %c0_5 = arith.constant 0 : index
    %5 = vector.load %arg4[%c0_3, %c0_4, %c0_5] : memref<1x128x32xf32, #tpu.memory_space<vmem>>, vector<1x128x32xf32>
    %6 = vector.shape_cast %5 : vector<1x128x32xf32> to vector<128x32xf32>
    %7 = arith.index_cast %arg2 : i32 to index
    %c0_6 = arith.constant 0 : index
    %c0_7 = arith.constant 0 : index
    %8 = vector.load %arg5[%7, %c0_6, %c0_7] : memref<1x32x32xf32, #tpu.memory_space<vmem>>, vector<1x32x32xf32>
    %9 = vector.shape_cast %8 : vector<1x32x32xf32> to vector<32x32xf32>
    %10 = arith.index_cast %arg2 : i32 to index
    %c0_8 = arith.constant 0 : index
    %c0_9 = arith.constant 0 : index
    %11 = vector.load %arg7[%10, %c0_8, %c0_9] : memref<1x32x64xf32, #tpu.memory_space<vmem>>, vector<1x32x64xf32>
    %12 = vector.shape_cast %11 : vector<1x32x64xf32> to vector<32x64xf32>
    %13 = arith.index_cast %arg2 : i32 to index
    %c0_10 = arith.constant 0 : index
    %c0_11 = arith.constant 0 : index
    %14 = vector.load %arg9[%13, %c0_10, %c0_11] : memref<1x32x32xf32, #tpu.memory_space<vmem>>, vector<1x32x32xf32>
    %15 = vector.shape_cast %14 : vector<1x32x32xf32> to vector<32x32xf32>
    %cst = arith.constant dense<0.000000e+00> : vector<8x32xf32>
    %16 = tpu.matmul %4, %9, %cst {dimension_numbers = #tpu.dot_dimension_numbers<[1], [0], [0], [1], [0, 0, 1, 1], [], []>} : vector<8x32xf32>, vector<32x32xf32>, vector<8x32xf32> -> vector<8x32xf32>
    %17 = arith.index_cast %arg2 : i32 to index
    %c0_12 = arith.constant 0 : index
    %c0_13 = arith.constant 0 : index
    %18 = vector.load %arg6[%17, %c0_12, %c0_13] : memref<1x1x32xf32, #tpu.memory_space<vmem>>, vector<1x1x32xf32>
    %19 = vector.shape_cast %18 : vector<1x1x32xf32> to vector<1x32xf32>
    %20 = vector.broadcast %19 : vector<1x32xf32> to vector<8x32xf32>
    %21 = arith.addf %16, %20 : vector<8x32xf32>
    %cst_14 = arith.constant dense<0.000000e+00> : vector<128x64xf32>
    %22 = tpu.matmul %6, %12, %cst_14 {dimension_numbers = #tpu.dot_dimension_numbers<[1], [0], [0], [1], [0, 0, 1, 1], [], []>} : vector<128x32xf32>, vector<32x64xf32>, vector<128x64xf32> -> vector<128x64xf32>
    %23 = arith.index_cast %arg2 : i32 to index
    %c0_15 = arith.constant 0 : index
    %c0_16 = arith.constant 0 : index
    %24 = vector.load %arg8[%23, %c0_15, %c0_16] : memref<1x1x64xf32, #tpu.memory_space<vmem>>, vector<1x1x64xf32>
    %25 = vector.shape_cast %24 : vector<1x1x64xf32> to vector<1x64xf32>
    %26 = vector.broadcast %25 : vector<1x64xf32> to vector<128x64xf32>
    %27 = arith.addf %22, %26 : vector<128x64xf32>
    %28 = vector.extract_strided_slice %27 {offsets = [0, 0], sizes = [128, 32], strides = [1, 1]} : vector<128x64xf32> to vector<128x32xf32>
    %29 = vector.extract_strided_slice %27 {offsets = [0, 32], sizes = [128, 32], strides = [1, 1]} : vector<128x64xf32> to vector<128x32xf32>
    %30 = tpu.iota {dimensions = array<i32: 1>} : vector<8x128xi32>
    %c8_i32 = arith.constant 8 : i32
    %31 = vector.broadcast %c8_i32 : i32 to vector<8x128xi32>
    %32 = arith.cmpi slt, %30, %31 : vector<8x128xi32>
    %33 = vector.extract_strided_slice %21 {offsets = [0, 0], sizes = [8, 8], strides = [1, 1]} : vector<8x32xf32> to vector<8x8xf32>
    %34 = vector.extract_strided_slice %28 {offsets = [0, 0], sizes = [128, 8], strides = [1, 1]} : vector<128x32xf32> to vector<128x8xf32>
    %35 = vector.extract_strided_slice %29 {offsets = [0, 0], sizes = [128, 8], strides = [1, 1]} : vector<128x32xf32> to vector<128x8xf32>
    %cst_17 = arith.constant dense<0.000000e+00> : vector<8x128xf32>
    %36 = tpu.matmul %33, %34, %cst_17 {dimension_numbers = #tpu.dot_dimension_numbers<[1], [1], [0], [0], [0, 0, 1, 0], [], []>} : vector<8x8xf32>, vector<128x8xf32>, vector<8x128xf32> -> vector<8x128xf32>
    %cst_18 = arith.constant -1.000000e+30 : f32
    %37 = vector.broadcast %cst_18 : f32 to vector<8x128xf32>
    %38 = arith.select %32, %36, %37 : vector<8x128xi1>, vector<8x128xf32>
    %cst_19 = arith.constant dense<0xFF800000> : vector<8xf32>
    %39 = vector.multi_reduction <maximumf>, %38, %cst_19 [1] : vector<8x128xf32> to vector<8xf32>
    %40 = vector.shape_cast %39 : vector<8xf32> to vector<8x1xf32>
    %41 = vector.broadcast %40 : vector<8x1xf32> to vector<8x128xf32>
    %42 = arith.subf %38, %41 : vector<8x128xf32>
    %43 = math.exp %42 : vector<8x128xf32>
    %cst_20 = arith.constant dense<0.000000e+00> : vector<8xf32>
    %44 = vector.multi_reduction <add>, %43, %cst_20 [1] : vector<8x128xf32> to vector<8xf32>
    %45 = vector.shape_cast %44 : vector<8xf32> to vector<8x1xf32>
    %46 = tpu.reciprocal %45 {approx = true} : vector<8x1xf32> -> vector<8x1xf32>
    %47 = vector.broadcast %46 : vector<8x1xf32> to vector<8x128xf32>
    %48 = arith.mulf %43, %47 : vector<8x128xf32>
    %c0_21 = arith.constant 0 : index
    %c0_22 = arith.constant 0 : index
    %c0_23 = arith.constant 0 : index
    %c0_24 = arith.constant 0 : index
    %49 = vector.load %arg12[%c0_21, %c0_22, %c0_23, %c0_24] : memref<1x4x8x128xf32, #tpu.memory_space<vmem>>, vector<1x1x8x128xf32>
    %50 = vector.shape_cast %49 : vector<1x1x8x128xf32> to vector<8x128xf32>
    %51 = vector.shape_cast %48 : vector<8x128xf32> to vector<1x1x8x128xf32>
    tpu.vector_store %arg12[%c0_21, %c0_22, %c0_23, %c0_24], %51 {strides = array<i32>} : memref<1x4x8x128xf32, #tpu.memory_space<vmem>>, vector<1x1x8x128xf32>,
    %cst_25 = arith.constant dense<0.000000e+00> : vector<8x8xf32>
    %52 = tpu.matmul %48, %35, %cst_25 {dimension_numbers = #tpu.dot_dimension_numbers<[1], [0], [0], [1], [0, 0, 1, 1], [], []>} : vector<8x128xf32>, vector<128x8xf32>, vector<8x8xf32> -> vector<8x8xf32>
    %53 = vector.extract_strided_slice %21 {offsets = [0, 8], sizes = [8, 8], strides = [1, 1]} : vector<8x32xf32> to vector<8x8xf32>
    %54 = vector.extract_strided_slice %28 {offsets = [0, 8], sizes = [128, 8], strides = [1, 1]} : vector<128x32xf32> to vector<128x8xf32>
    %55 = vector.extract_strided_slice %29 {offsets = [0, 8], sizes = [128, 8], strides = [1, 1]} : vector<128x32xf32> to vector<128x8xf32>
    %cst_26 = arith.constant dense<0.000000e+00> : vector<8x128xf32>
    %56 = tpu.matmul %53, %54, %cst_26 {dimension_numbers = #tpu.dot_dimension_numbers<[1], [1], [0], [0], [0, 0, 1, 0], [], []>} : vector<8x8xf32>, vector<128x8xf32>, vector<8x128xf32> -> vector<8x128xf32>
    %cst_27 = arith.constant -1.000000e+30 : f32
    %57 = vector.broadcast %cst_27 : f32 to vector<8x128xf32>
    %58 = arith.select %32, %56, %57 : vector<8x128xi1>, vector<8x128xf32>
    %cst_28 = arith.constant dense<0xFF800000> : vector<8xf32>
    %59 = vector.multi_reduction <maximumf>, %58, %cst_28 [1] : vector<8x128xf32> to vector<8xf32>
    %60 = vector.shape_cast %59 : vector<8xf32> to vector<8x1xf32>
    %61 = vector.broadcast %60 : vector<8x1xf32> to vector<8x128xf32>
    %62 = arith.subf %58, %61 : vector<8x128xf32>
    %63 = math.exp %62 : vector<8x128xf32>
    %cst_29 = arith.constant dense<0.000000e+00> : vector<8xf32>
    %64 = vector.multi_reduction <add>, %63, %cst_29 [1] : vector<8x128xf32> to vector<8xf32>
    %65 = vector.shape_cast %64 : vector<8xf32> to vector<8x1xf32>
    %66 = tpu.reciprocal %65 {approx = true} : vector<8x1xf32> -> vector<8x1xf32>
    %67 = vector.broadcast %66 : vector<8x1xf32> to vector<8x128xf32>
    %68 = arith.mulf %63, %67 : vector<8x128xf32>
    %c0_30 = arith.constant 0 : index
    %c1 = arith.constant 1 : index
    %c0_31 = arith.constant 0 : index
    %c0_32 = arith.constant 0 : index
    %69 = vector.load %arg12[%c0_30, %c1, %c0_31, %c0_32] : memref<1x4x8x128xf32, #tpu.memory_space<vmem>>, vector<1x1x8x128xf32>
    %70 = vector.shape_cast %69 : vector<1x1x8x128xf32> to vector<8x128xf32>
    %71 = vector.shape_cast %68 : vector<8x128xf32> to vector<1x1x8x128xf32>
    tpu.vector_store %arg12[%c0_30, %c1, %c0_31, %c0_32], %71 {strides = array<i32>} : memref<1x4x8x128xf32, #tpu.memory_space<vmem>>, vector<1x1x8x128xf32>,
    %cst_33 = arith.constant dense<0.000000e+00> : vector<8x8xf32>
    %72 = tpu.matmul %68, %55, %cst_33 {dimension_numbers = #tpu.dot_dimension_numbers<[1], [0], [0], [1], [0, 0, 1, 1], [], []>} : vector<8x128xf32>, vector<128x8xf32>, vector<8x8xf32> -> vector<8x8xf32>
    %73 = vector.extract_strided_slice %21 {offsets = [0, 16], sizes = [8, 8], strides = [1, 1]} : vector<8x32xf32> to vector<8x8xf32>
    %74 = vector.extract_strided_slice %28 {offsets = [0, 16], sizes = [128, 8], strides = [1, 1]} : vector<128x32xf32> to vector<128x8xf32>
    %75 = vector.extract_strided_slice %29 {offsets = [0, 16], sizes = [128, 8], strides = [1, 1]} : vector<128x32xf32> to vector<128x8xf32>
    %cst_34 = arith.constant dense<0.000000e+00> : vector<8x128xf32>
    %76 = tpu.matmul %73, %74, %cst_34 {dimension_numbers = #tpu.dot_dimension_numbers<[1], [1], [0], [0], [0, 0, 1, 0], [], []>} : vector<8x8xf32>, vector<128x8xf32>, vector<8x128xf32> -> vector<8x128xf32>
    %cst_35 = arith.constant -1.000000e+30 : f32
    %77 = vector.broadcast %cst_35 : f32 to vector<8x128xf32>
    %78 = arith.select %32, %76, %77 : vector<8x128xi1>, vector<8x128xf32>
    %cst_36 = arith.constant dense<0xFF800000> : vector<8xf32>
    %79 = vector.multi_reduction <maximumf>, %78, %cst_36 [1] : vector<8x128xf32> to vector<8xf32>
    %80 = vector.shape_cast %79 : vector<8xf32> to vector<8x1xf32>
    %81 = vector.broadcast %80 : vector<8x1xf32> to vector<8x128xf32>
    %82 = arith.subf %78, %81 : vector<8x128xf32>
    %83 = math.exp %82 : vector<8x128xf32>
    %cst_37 = arith.constant dense<0.000000e+00> : vector<8xf32>
    %84 = vector.multi_reduction <add>, %83, %cst_37 [1] : vector<8x128xf32> to vector<8xf32>
    %85 = vector.shape_cast %84 : vector<8xf32> to vector<8x1xf32>
    %86 = tpu.reciprocal %85 {approx = true} : vector<8x1xf32> -> vector<8x1xf32>
    %87 = vector.broadcast %86 : vector<8x1xf32> to vector<8x128xf32>
    %88 = arith.mulf %83, %87 : vector<8x128xf32>
    %c0_38 = arith.constant 0 : index
    %c2 = arith.constant 2 : index
    %c0_39 = arith.constant 0 : index
    %c0_40 = arith.constant 0 : index
    %89 = vector.load %arg12[%c0_38, %c2, %c0_39, %c0_40] : memref<1x4x8x128xf32, #tpu.memory_space<vmem>>, vector<1x1x8x128xf32>
    %90 = vector.shape_cast %89 : vector<1x1x8x128xf32> to vector<8x128xf32>
    %91 = vector.shape_cast %88 : vector<8x128xf32> to vector<1x1x8x128xf32>
    tpu.vector_store %arg12[%c0_38, %c2, %c0_39, %c0_40], %91 {strides = array<i32>} : memref<1x4x8x128xf32, #tpu.memory_space<vmem>>, vector<1x1x8x128xf32>,
    %cst_41 = arith.constant dense<0.000000e+00> : vector<8x8xf32>
    %92 = tpu.matmul %88, %75, %cst_41 {dimension_numbers = #tpu.dot_dimension_numbers<[1], [0], [0], [1], [0, 0, 1, 1], [], []>} : vector<8x128xf32>, vector<128x8xf32>, vector<8x8xf32> -> vector<8x8xf32>
    %93 = vector.extract_strided_slice %21 {offsets = [0, 24], sizes = [8, 8], strides = [1, 1]} : vector<8x32xf32> to vector<8x8xf32>
    %94 = vector.extract_strided_slice %28 {offsets = [0, 24], sizes = [128, 8], strides = [1, 1]} : vector<128x32xf32> to vector<128x8xf32>
    %95 = vector.extract_strided_slice %29 {offsets = [0, 24], sizes = [128, 8], strides = [1, 1]} : vector<128x32xf32> to vector<128x8xf32>
    %cst_42 = arith.constant dense<0.000000e+00> : vector<8x128xf32>
    %96 = tpu.matmul %93, %94, %cst_42 {dimension_numbers = #tpu.dot_dimension_numbers<[1], [1], [0], [0], [0, 0, 1, 0], [], []>} : vector<8x8xf32>, vector<128x8xf32>, vector<8x128xf32> -> vector<8x128xf32>
    %cst_43 = arith.constant -1.000000e+30 : f32
    %97 = vector.broadcast %cst_43 : f32 to vector<8x128xf32>
    %98 = arith.select %32, %96, %97 : vector<8x128xi1>, vector<8x128xf32>
    %cst_44 = arith.constant dense<0xFF800000> : vector<8xf32>
    %99 = vector.multi_reduction <maximumf>, %98, %cst_44 [1] : vector<8x128xf32> to vector<8xf32>
    %100 = vector.shape_cast %99 : vector<8xf32> to vector<8x1xf32>
    %101 = vector.broadcast %100 : vector<8x1xf32> to vector<8x128xf32>
    %102 = arith.subf %98, %101 : vector<8x128xf32>
    %103 = math.exp %102 : vector<8x128xf32>
    %cst_45 = arith.constant dense<0.000000e+00> : vector<8xf32>
    %104 = vector.multi_reduction <add>, %103, %cst_45 [1] : vector<8x128xf32> to vector<8xf32>
    %105 = vector.shape_cast %104 : vector<8xf32> to vector<8x1xf32>
    %106 = tpu.reciprocal %105 {approx = true} : vector<8x1xf32> -> vector<8x1xf32>
    %107 = vector.broadcast %106 : vector<8x1xf32> to vector<8x128xf32>
    %108 = arith.mulf %103, %107 : vector<8x128xf32>
    %c0_46 = arith.constant 0 : index
    %c3 = arith.constant 3 : index
    %c0_47 = arith.constant 0 : index
    %c0_48 = arith.constant 0 : index
    %109 = vector.load %arg12[%c0_46, %c3, %c0_47, %c0_48] : memref<1x4x8x128xf32, #tpu.memory_space<vmem>>, vector<1x1x8x128xf32>
    %110 = vector.shape_cast %109 : vector<1x1x8x128xf32> to vector<8x128xf32>
    %111 = vector.shape_cast %108 : vector<8x128xf32> to vector<1x1x8x128xf32>
    tpu.vector_store %arg12[%c0_46, %c3, %c0_47, %c0_48], %111 {strides = array<i32>} : memref<1x4x8x128xf32, #tpu.memory_space<vmem>>, vector<1x1x8x128xf32>,
    %cst_49 = arith.constant dense<0.000000e+00> : vector<8x8xf32>
    %112 = tpu.matmul %108, %95, %cst_49 {dimension_numbers = #tpu.dot_dimension_numbers<[1], [0], [0], [1], [0, 0, 1, 1], [], []>} : vector<8x128xf32>, vector<128x8xf32>, vector<8x8xf32> -> vector<8x8xf32>
    %113 = tpu.concatenate %52, %72, %92, %112 in 1 : vector<8x8xf32>, vector<8x8xf32>, vector<8x8xf32>, vector<8x8xf32> -> vector<8x32xf32>
    %c0_50 = arith.constant 0 : index
    %c0_51 = arith.constant 0 : index
    %114 = vector.load %arg13[%c0_50, %c0_51] : memref<8x32xf32, #tpu.memory_space<vmem>>, vector<8x32xf32>
    %cst_52 = arith.constant dense<0.000000e+00> : vector<8x32xf32>
    %115 = tpu.matmul %113, %15, %cst_52 {dimension_numbers = #tpu.dot_dimension_numbers<[1], [0], [0], [1], [0, 0, 1, 1], [], []>} : vector<8x32xf32>, vector<32x32xf32>, vector<8x32xf32> -> vector<8x32xf32>
    %116 = arith.addf %114, %115 : vector<8x32xf32>
    %c0_53 = arith.constant 0 : index
    %c0_54 = arith.constant 0 : index
    %117 = vector.load %arg13[%c0_53, %c0_54] : memref<8x32xf32, #tpu.memory_space<vmem>>, vector<8x32xf32>
    tpu.vector_store %arg13[%c0_53, %c0_54], %116 {strides = array<i32>} : memref<8x32xf32, #tpu.memory_space<vmem>>, vector<8x32xf32>,
    %c0_i32_55 = arith.constant 0 : i32
    %118 = arith.cmpi eq, %arg2, %c0_i32_55 : i32
    %119 = arith.extui %118 : i1 to i32
    %c0_i32_56 = arith.constant 0 : i32
    %120 = arith.cmpi ne, %119, %c0_i32_56 : i32
    scf.if %120 {
      %c0_57 = arith.constant 0 : index
      %c0_58 = arith.constant 0 : index
      %121 = vector.load %arg13[%c0_57, %c0_58] : memref<8x32xf32, #tpu.memory_space<vmem>>, vector<8x32xf32>
      %c0_59 = arith.constant 0 : index
      %c0_60 = arith.constant 0 : index
      %c0_61 = arith.constant 0 : index
      %122 = vector.load %arg11[%c0_59, %c0_60, %c0_61] : memref<1x8x32xf32, #tpu.memory_space<vmem>>, vector<1x8x32xf32>
      %123 = vector.shape_cast %122 : vector<1x8x32xf32> to vector<8x32xf32>
      %124 = vector.shape_cast %121 : vector<8x32xf32> to vector<1x8x32xf32>
      tpu.vector_store %arg11[%c0_59, %c0_60, %c0_61], %124 {strides = array<i32>} : memref<1x8x32xf32, #tpu.memory_space<vmem>>, vector<1x8x32xf32>,
    } else {
    }
    return
  }
  func.func @transform_0(%arg0: i32, %arg1: i32, %arg2: i32) -> (i32, i32, i32) {
    %c0_i32 = arith.constant 0 : i32
    %c0_i32_0 = arith.constant 0 : i32
    return %arg0, %arg1, %c0_i32 : i32, i32, i32
  }
  func.func @transform_1(%arg0: i32, %arg1: i32, %arg2: i32) -> (i32, i32, i32) {
    %c0_i32 = arith.constant 0 : i32
    %c0_i32_0 = arith.constant 0 : i32
    %c0_i32_1 = arith.constant 0 : i32
    return %arg0, %c0_i32, %c0_i32_0 : i32, i32, i32
  }
  func.func @transform_2(%arg0: i32, %arg1: i32, %arg2: i32) -> (i32, i32, i32) {
    %c0_i32 = arith.constant 0 : i32
    %c0_i32_0 = arith.constant 0 : i32
    %c0_i32_1 = arith.constant 0 : i32
    %c0_i32_2 = arith.constant 0 : i32
    return %c0_i32, %c0_i32_0, %c0_i32_1 : i32, i32, i32
  }
  func.func @transform_3(%arg0: i32, %arg1: i32, %arg2: i32) -> (i32, i32, i32) {
    %c0_i32 = arith.constant 0 : i32
    %c0_i32_0 = arith.constant 0 : i32
    %c0_i32_1 = arith.constant 0 : i32
    %c0_i32_2 = arith.constant 0 : i32
    return %c0_i32, %c0_i32_0, %c0_i32_1 : i32, i32, i32
  }
  func.func @transform_4(%arg0: i32, %arg1: i32, %arg2: i32) -> (i32, i32, i32) {
    %c0_i32 = arith.constant 0 : i32
    %c0_i32_0 = arith.constant 0 : i32
    %c0_i32_1 = arith.constant 0 : i32
    %c0_i32_2 = arith.constant 0 : i32
    return %c0_i32, %c0_i32_0, %c0_i32_1 : i32, i32, i32
  }
  func.func @transform_5(%arg0: i32, %arg1: i32, %arg2: i32) -> (i32, i32, i32) {
    %c0_i32 = arith.constant 0 : i32
    %c0_i32_0 = arith.constant 0 : i32
    %c0_i32_1 = arith.constant 0 : i32
    %c0_i32_2 = arith.constant 0 : i32
    return %c0_i32, %c0_i32_0, %c0_i32_1 : i32, i32, i32
  }
  func.func @transform_6(%arg0: i32, %arg1: i32, %arg2: i32) -> (i32, i32, i32) {
    %c0_i32 = arith.constant 0 : i32
    %c0_i32_0 = arith.constant 0 : i32
    %c0_i32_1 = arith.constant 0 : i32
    %c0_i32_2 = arith.constant 0 : i32
    return %c0_i32, %c0_i32_0, %c0_i32_1 : i32, i32, i32
  }
  func.func @transform_7(%arg0: i32, %arg1: i32, %arg2: i32) -> (i32, i32) {
    %c0_i32 = arith.constant 0 : i32
    %c0_i32_0 = arith.constant 0 : i32
    %c0_i32_1 = arith.constant 0 : i32
    return %c0_i32, %c0_i32_0 : i32, i32
  }
  func.func @transform_8(%arg0: i32, %arg1: i32, %arg2: i32) -> (i32, i32, i32) {
    %c0_i32 = arith.constant 0 : i32
    %c0_i32_0 = arith.constant 0 : i32
    return %arg0, %arg1, %c0_i32 : i32, i32, i32
  }
  func.func @transform_9(%arg0: i32, %arg1: i32, %arg2: i32) -> (i32, i32, i32, i32) {
    %c0_i32 = arith.constant 0 : i32
    %c0_i32_0 = arith.constant 0 : i32
    return %arg0, %arg2, %arg1, %c0_i32 : i32, i32, i32, i32
  }
}

</mosaic_0001>

<llo_original>
// kernel: tpu_custom_call.1
$region0: #{tpu_custom_call.1}
  #allocation0 [shape = 'u32[]', space=smem, size = 0x4, offset = 0x4, fixed_abs, tag = 'smem constant byte address 0x4 - core index']
  #allocation1 [shape = 'u32[72,128]{1,0:T(1,128)}', space=vmem, size = 0x9000, scoped, tag = 'internal scratch']
  #allocation2 [shape = 'f32[8,32]{1,0:T(8,128)}', space=vmem, size = 0x1000, scoped, tag = 'scratch operand']
  %s0 = inlined_call_operand.vmem [shape: f32[2,128,32], index: 0, kind: input, shape index: {}]
  %s1 = inlined_call_operand.vmem [shape: f32[2,128,32], index: 1, kind: input, shape index: {}]
  %s2 = inlined_call_operand.vmem [shape: f32[1,32,32], index: 2, kind: input, shape index: {}]
  %s3 = inlined_call_operand.vmem [shape: f32[1,1,32], index: 3, kind: input, shape index: {}]
  %s4 = inlined_call_operand.vmem [shape: f32[1,32,64], index: 4, kind: input, shape index: {}]
  %s5 = inlined_call_operand.vmem [shape: f32[1,1,64], index: 5, kind: input, shape index: {}]
  %s6 = inlined_call_operand.vmem [shape: f32[1,32,32], index: 6, kind: input, shape index: {}]
  %s7 = inlined_call_operand.vmem [shape: f32[1,32], index: 7, kind: input, shape index: {}]
  %s8 = inlined_call_operand.hbm [shape: f32[2,8,32], index: 8, kind: output, shape index: {0}]
  %s9 = inlined_call_operand.hbm [shape: f32[2,4,8,128], index: 9, kind: output, shape index: {1}]
  %10 = xla_tuple %s8, %s9
  %s11 = sld [smem:[#allocation0]]
  $region81: #{tpu_custom_call.1} parent=0
    _
  %s13 = ssub.s32 1, %s11
  %s14 = scalar_select 0, %s13, %s11
  $region1: #{tpu_custom_call.1} parent=0
    #allocation3 [shape = 'u8[8192]{0}', space=vmem, size = 0x2000, scoped, tag = 'output window, operand 0']
    #allocation4 [shape = 's32[2]{0}', space=sflag, size = 0x8, scoped, tag = 'scoped memory for tpu_custom_call.1']
    #allocation5 [shape = 'u8[32768]{0}', space=vmem, size = 0x8000, scoped, tag = 'output window, operand 1']
    #allocation6 [shape = 's32[2]{0}', space=sflag, size = 0x8, scoped, tag = 'scoped memory for tpu_custom_call.1']
    %15 = vsyncpa [#allocation4], 0
    %s16 = scalar_lea.sflag [#allocation4], 1
    %17 = vsyncpa %s16, 0
    %18 = vsyncpa [#allocation6], 0
    %s19 = scalar_lea.sflag [#allocation6], 1
    %20 = vsyncpa %s19, 0
    loop: start=0, step=1, limit=4
    $region2: #{tpu_custom_call.1} parent=1 // loop_pre_header
      _
    $region3: #{tpu_custom_call.1} parent=1 // loop_header
      %s22 = sphi 0, %s26
      %p23 = scmp.ge.s32.totalorder %s22, 4
      %s29 = sphi 0, %s48
      %s30 = sphi 0, %s44
      %s31 = sphi 0, %s40
      %s32 = sphi 0, %s29
      %s33 = sphi 0, %s30
      %s34 = sphi 0, %s31
      %s35 = sphi 0, %s32
      %s36 = sphi 0, %s33
      %s37 = sphi 0, %s34
      %s53 = sphi 0, %s55
      %s56 = sphi 0, %s53
      %s57 = sphi 0, %s56
      %s73 = sphi 0, %s57
      %s79 = sphi 0, %s81
      %s82 = sphi 0, %s79
      %s83 = sphi 0, %s82
      %s99 = sphi 0, %s83
      %s103 = sphi 0, %s103
      %s105 = sphi 0, %s103
      %s106 = sphi 0, %s105
      %s120 = sphi 0, %s106
      %s124 = sphi 0, %s124
      %s126 = sphi 0, %s124
      %s127 = sphi 0, %s126
      %s141 = sphi 0, %s127
      %s145 = sphi 0, %s145
      %s147 = sphi 0, %s145
      %s148 = sphi 0, %s147
      %s162 = sphi 0, %s148
      %s166 = sphi 0, %s166
      %s168 = sphi 0, %s166
      %s169 = sphi 0, %s168
      %s183 = sphi 0, %s169
      %s187 = sphi 0, %s187
      %s189 = sphi 0, %s187
      %s190 = sphi 0, %s189
      %s204 = sphi 0, %s190
      %s208 = sphi 0, %s208
      %s210 = sphi 0, %s208
      %s211 = sphi 0, %s210
      %s225 = sphi 0, %s211
      %s233 = sphi 0, %s235
      %s236 = sphi 0, %s233
      %s237 = sphi 0, %s236
      %s253 = sphi 0, %s237
      %s263 = sphi 0, %s265
      %s266 = sphi 0, %s263
      %s267 = sphi 0, %s266
      %s283 = sphi 0, %s267
    $region4: #{tpu_custom_call.1} parent=1 // loop_header_branch
      %25 = sbr.rel (%p23) target = $region8
    $region5: #{tpu_custom_call.1} parent=1 // loop_body
      %s27 = ssub.s32 %s22, 1
      %s28 = ssub.s32 %s22, 2
      %s38 = sadd.s32 1, %s31
      %p39 = scmp.ge.s32.totalorder %s38, 1
      %s40 = scalar_select %p39, 0, %s38
      %s41 = sadd.s32 1, %s30
      %s42 = scalar_select %p39, %s41, %s30
      %p43 = scmp.ge.s32.totalorder %s42, 1
      %s44 = scalar_select %p43, 0, %s42
      %s45 = sadd.s32 1, %s29
      %s46 = scalar_select %p43, %s45, %s29
      %p47 = scmp.ge.s32.totalorder %s46, 2
      %s48 = scalar_select %p47, 0, %s46
      %s49 = ssub.s32 %s29, %s48
      %s50 = ssub.s32 %s30, %s44
      %s51 = sor.u32 %s49, %s50
      %p52 = scmp.eq.s32.totalorder %s51, 0
      %s54 = sadd.s32 %s53, 1
      %s55 = scalar_select %p52, %s53, %s54
      %p58 = pneg %p52
      %p59 = scmp.eq.s32.totalorder %s22, 1
      %p60 = por %p58, %p59
      %p61 = scmp.ne.s32.totalorder %s53, %s56
      %p62 = scmp.eq.s32.totalorder %s22, 0
      %p63 = por %p61, %p62
      %p64 = scmp.ne.s32.totalorder %s53, %s56
      %p65 = scmp.eq.s32.totalorder %s27, 1
      %p66 = por %p64, %p65
      %p67 = scmp.ne.s32.totalorder %s56, %s57
      %p68 = scmp.eq.s32.totalorder %s27, 0
      %p69 = por %p67, %p68
      %p70 = scmp.ne.s32.totalorder %s56, %s57
      %p71 = scmp.eq.s32.totalorder %s28, 1
      %p72 = por %p70, %p71
      %p74 = scmp.ne.s32.totalorder %s57, %s73
      %p75 = scmp.eq.s32.totalorder %s28, 0
      %p76 = por %p74, %p75
      %s77 = ssub.s32 %s29, %s48
      %p78 = scmp.eq.s32.totalorder %s77, 0
      %s80 = sadd.s32 %s79, 1
      %s81 = scalar_select %p78, %s79, %s80
      %p84 = pneg %p78
      %p85 = scmp.eq.s32.totalorder %s22, 1
      %p86 = por %p84, %p85
      %p87 = scmp.ne.s32.totalorder %s79, %s82
      %p88 = scmp.eq.s32.totalorder %s22, 0
      %p89 = por %p87, %p88
      %p90 = scmp.ne.s32.totalorder %s79, %s82
      %p91 = scmp.eq.s32.totalorder %s27, 1
      %p92 = por %p90, %p91
      %p93 = scmp.ne.s32.totalorder %s82, %s83
      %p94 = scmp.eq.s32.totalorder %s27, 0
      %p95 = por %p93, %p94
      %p96 = scmp.ne.s32.totalorder %s82, %s83
      %p97 = scmp.eq.s32.totalorder %s28, 1
      %p98 = por %p96, %p97
      %p100 = scmp.ne.s32.totalorder %s83, %s99
      %p101 = scmp.eq.s32.totalorder %s28, 0
      %p102 = por %p100, %p101
      %s104 = sadd.s32 %s103, 1
      %p107 = scmp.eq.s32.totalorder %s22, 1
      %p108 = scmp.ne.s32.totalorder %s103, %s105
      %p109 = scmp.eq.s32.totalorder %s22, 0
      %p110 = por %p108, %p109
      %p111 = scmp.ne.s32.totalorder %s103, %s105
      %p112 = scmp.eq.s32.totalorder %s27, 1
      %p113 = por %p111, %p112
      %p114 = scmp.ne.s32.totalorder %s105, %s106
      %p115 = scmp.eq.s32.totalorder %s27, 0
      %p116 = por %p114, %p115
      %p117 = scmp.ne.s32.totalorder %s105, %s106
      %p118 = scmp.eq.s32.totalorder %s28, 1
      %p119 = por %p117, %p118
      %p121 = scmp.ne.s32.totalorder %s106, %s120
      %p122 = scmp.eq.s32.totalorder %s28, 0
      %p123 = por %p121, %p122
      %s125 = sadd.s32 %s124, 1
      %p128 = scmp.eq.s32.totalorder %s22, 1
      %p129 = scmp.ne.s32.totalorder %s124, %s126
      %p130 = scmp.eq.s32.totalorder %s22, 0
      %p131 = por %p129, %p130
      %p132 = scmp.ne.s32.totalorder %s124, %s126
      %p133 = scmp.eq.s32.totalorder %s27, 1
      %p134 = por %p132, %p133
      %p135 = scmp.ne.s32.totalorder %s126, %s127
      %p136 = scmp.eq.s32.totalorder %s27, 0
      %p137 = por %p135, %p136
      %p138 = scmp.ne.s32.totalorder %s126, %s127
      %p139 = scmp.eq.s32.totalorder %s28, 1
      %p140 = por %p138, %p139
      %p142 = scmp.ne.s32.totalorder %s127, %s141
      %p143 = scmp.eq.s32.totalorder %s28, 0
      %p144 = por %p142, %p143
      %s146 = sadd.s32 %s145, 1
      %p149 = scmp.eq.s32.totalorder %s22, 1
      %p150 = scmp.ne.s32.totalorder %s145, %s147
      %p151 = scmp.eq.s32.totalorder %s22, 0
      %p152 = por %p150, %p151
      %p153 = scmp.ne.s32.totalorder %s145, %s147
      %p154 = scmp.eq.s32.totalorder %s27, 1
      %p155 = por %p153, %p154
      %p156 = scmp.ne.s32.totalorder %s147, %s148
      %p157 = scmp.eq.s32.totalorder %s27, 0
      %p158 = por %p156, %p157
      %p159 = scmp.ne.s32.totalorder %s147, %s148
      %p160 = scmp.eq.s32.totalorder %s28, 1
      %p161 = por %p159, %p160
      %p163 = scmp.ne.s32.totalorder %s148, %s162
      %p164 = scmp.eq.s32.totalorder %s28, 0
      %p165 = por %p163, %p164
      %s167 = sadd.s32 %s166, 1
      %p170 = scmp.eq.s32.totalorder %s22, 1
      %p171 = scmp.ne.s32.totalorder %s166, %s168
      %p172 = scmp.eq.s32.totalorder %s22, 0
      %p173 = por %p171, %p172
      %p174 = scmp.ne.s32.totalorder %s166, %s168
      %p175 = scmp.eq.s32.totalorder %s27, 1
      %p176 = por %p174, %p175
      %p177 = scmp.ne.s32.totalorder %s168, %s169
      %p178 = scmp.eq.s32.totalorder %s27, 0
      %p179 = por %p177, %p178
      %p180 = scmp.ne.s32.totalorder %s168, %s169
      %p181 = scmp.eq.s32.totalorder %s28, 1
      %p182 = por %p180, %p181
      %p184 = scmp.ne.s32.totalorder %s169, %s183
      %p185 = scmp.eq.s32.totalorder %s28, 0
      %p186 = por %p184, %p185
      %s188 = sadd.s32 %s187, 1
      %p191 = scmp.eq.s32.totalorder %s22, 1
      %p192 = scmp.ne.s32.totalorder %s187, %s189
      %p193 = scmp.eq.s32.totalorder %s22, 0
      %p194 = por %p192, %p193
      %p195 = scmp.ne.s32.totalorder %s187, %s189
      %p196 = scmp.eq.s32.totalorder %s27, 1
      %p197 = por %p195, %p196
      %p198 = scmp.ne.s32.totalorder %s189, %s190
      %p199 = scmp.eq.s32.totalorder %s27, 0
      %p200 = por %p198, %p199
      %p201 = scmp.ne.s32.totalorder %s189, %s190
      %p202 = scmp.eq.s32.totalorder %s28, 1
      %p203 = por %p201, %p202
      %p205 = scmp.ne.s32.totalorder %s190, %s204
      %p206 = scmp.eq.s32.totalorder %s28, 0
      %p207 = por %p205, %p206
      %s209 = sadd.s32 %s208, 1
      %p212 = scmp.eq.s32.totalorder %s22, 1
      %p213 = scmp.ne.s32.totalorder %s208, %s210
      %p214 = scmp.eq.s32.totalorder %s22, 0
      %p215 = por %p213, %p214
      %p216 = scmp.ne.s32.totalorder %s208, %s210
      %p217 = scmp.eq.s32.totalorder %s27, 1
      %p218 = por %p216, %p217
      %p219 = scmp.ne.s32.totalorder %s210, %s211
      %p220 = scmp.eq.s32.totalorder %s27, 0
      %p221 = por %p219, %p220
      %p222 = scmp.ne.s32.totalorder %s210, %s211
      %p223 = scmp.eq.s32.totalorder %s28, 1
      %p224 = por %p222, %p223
      %p226 = scmp.ne.s32.totalorder %s211, %s225
      %p227 = scmp.eq.s32.totalorder %s28, 0
      %p228 = por %p226, %p227
      %s229 = ssub.s32 %s29, %s48
      %s230 = ssub.s32 %s30, %s44
      %s231 = sor.u32 %s229, %s230
      %p232 = scmp.eq.s32.totalorder %s231, 0
      %s234 = sadd.s32 %s233, 1
      %s235 = scalar_select %p232, %s233, %s234
      %p238 = pneg %p232
      %p239 = scmp.eq.s32.totalorder %s22, 1
      %p240 = por %p238, %p239
      %p241 = scmp.ne.s32.totalorder %s233, %s236
      %p242 = scmp.eq.s32.totalorder %s22, 0
      %p243 = por %p241, %p242
      %p244 = scmp.ne.s32.totalorder %s233, %s236
      %p245 = scmp.eq.s32.totalorder %s27, 1
      %p246 = por %p244, %p245
      %p247 = scmp.ne.s32.totalorder %s236, %s237
      %p248 = scmp.eq.s32.totalorder %s27, 0
      %p249 = por %p247, %p248
      %p250 = scmp.ne.s32.totalorder %s236, %s237
      %p251 = scmp.eq.s32.totalorder %s28, 1
      %p252 = por %p250, %p251
      %p254 = scmp.ne.s32.totalorder %s237, %s253
      %p255 = scmp.eq.s32.totalorder %s28, 0
      %p256 = por %p254, %p255
      %s257 = ssub.s32 %s29, %s48
      %s258 = ssub.s32 %s31, %s40
      %s259 = sor.u32 %s257, %s258
      %s260 = ssub.s32 %s30, %s44
      %s261 = sor.u32 %s259, %s260
      %p262 = scmp.eq.s32.totalorder %s261, 0
      %s264 = sadd.s32 %s263, 1
      %s265 = scalar_select %p262, %s263, %s264
      %p268 = pneg %p262
      %p269 = scmp.eq.s32.totalorder %s22, 1
      %p270 = por %p268, %p269
      %p271 = scmp.ne.s32.totalorder %s263, %s266
      %p272 = scmp.eq.s32.totalorder %s22, 0
      %p273 = por %p271, %p272
      %p274 = scmp.ne.s32.totalorder %s263, %s266
      %p275 = scmp.eq.s32.totalorder %s27, 1
      %p276 = por %p274, %p275
      %p277 = scmp.ne.s32.totalorder %s266, %s267
      %p278 = scmp.eq.s32.totalorder %s27, 0
      %p279 = por %p277, %p278
      %p280 = scmp.ne.s32.totalorder %s266, %s267
      %p281 = scmp.eq.s32.totalorder %s28, 1
      %p282 = por %p280, %p281
      %p284 = scmp.ne.s32.totalorder %s267, %s283
      %p285 = scmp.eq.s32.totalorder %s28, 0
      %p286 = por %p284, %p285
      %p287 = scmp.le.s32.totalorder 1, %s22
      %p288 = scmp.lt.s32.totalorder %s22, 3
      %p289 = pnand %p287, %p288
      %p290 = pneg %p289
      // Predicated region
      $region9: #{tpu_custom_call.1} parent=5 // pred_check
        _
      $region10: #{tpu_custom_call.1} parent=5 // pred_check_branch
        %292 = sbr.rel (%p289) target = $region12
      $region11: #{tpu_custom_call.1} parent=5 // pred_region
        %s293 = ssub.s32 %s22, 1
        // Predicated region
        $region13: #{tpu_custom_call.1} parent=11 // pred_check
          %p294 = pneg %p116
        $region14: #{tpu_custom_call.1} parent=11 // pred_check_branch
          %296 = sbr.rel (%p294) target = $region16
        $region15: #{tpu_custom_call.1} parent=11 // pred_region
          _
        $region16: #{tpu_custom_call.1} parent=11 // pred_fallthru
          _
        // Predicated region
        $region17: #{tpu_custom_call.1} parent=11 // pred_check
          %p297 = pneg %p137
        $region18: #{tpu_custom_call.1} parent=11 // pred_check_branch
          %299 = sbr.rel (%p297) target = $region20
        $region19: #{tpu_custom_call.1} parent=11 // pred_region
          _
        $region20: #{tpu_custom_call.1} parent=11 // pred_fallthru
          _
        // Predicated region
        $region21: #{tpu_custom_call.1} parent=11 // pred_check
          %p300 = pneg %p158
        $region22: #{tpu_custom_call.1} parent=11 // pred_check_branch
          %302 = sbr.rel (%p300) target = $region24
        $region23: #{tpu_custom_call.1} parent=11 // pred_region
          _
        $region24: #{tpu_custom_call.1} parent=11 // pred_fallthru
          _
        // Predicated region
        $region25: #{tpu_custom_call.1} parent=11 // pred_check
          %p303 = pneg %p179
        $region26: #{tpu_custom_call.1} parent=11 // pred_check_branch
          %305 = sbr.rel (%p303) target = $region28
        $region27: #{tpu_custom_call.1} parent=11 // pred_region
          _
        $region28: #{tpu_custom_call.1} parent=11 // pred_fallthru
          _
        // Predicated region
        $region29: #{tpu_custom_call.1} parent=11 // pred_check
          %p306 = pneg %p200
        $region30: #{tpu_custom_call.1} parent=11 // pred_check_branch
          %308 = sbr.rel (%p306) target = $region32
        $region31: #{tpu_custom_call.1} parent=11 // pred_region
          _
        $region32: #{tpu_custom_call.1} parent=11 // pred_fallthru
          _
        // Predicated region
        $region33: #{tpu_custom_call.1} parent=11 // pred_check
          %p309 = pneg %p221
        $region34: #{tpu_custom_call.1} parent=11 // pred_check_branch
          %311 = sbr.rel (%p309) target = $region36
        $region35: #{tpu_custom_call.1} parent=11 // pred_region
          _
        $region36: #{tpu_custom_call.1} parent=11 // pred_fallthru
          _
      $region12: #{tpu_custom_call.1} parent=5 // pred_fallthru
        _
      %p312 = scmp.lt.s32.totalorder %s22, 2
      // Predicated region
      $region37: #{tpu_custom_call.1} parent=5 // pred_check
        %p313 = pneg %p312
      $region38: #{tpu_custom_call.1} parent=5 // pred_check_branch
        %315 = sbr.rel (%p313) target = $region40
      $region39: #{tpu_custom_call.1} parent=5 // pred_region
        // Predicated region
        $region41: #{tpu_custom_call.1} parent=39 // pred_check
          %p316 = pneg %p63
        $region42: #{tpu_custom_call.1} parent=39 // pred_check_branch
          %318 = sbr.rel (%p316) target = $region44
        $region43: #{tpu_custom_call.1} parent=39 // pred_region
          %p319 = scmp.lt.s32.totalorder %s29, 1
          %s320 = scalar_select %p319, %s29, 1
          %p321 = scmp.lt.s32.totalorder %s30, 15
          %s322 = scalar_select %p321, %s30, 15
          %s323 = smul.addr %s320, 16
          %s324 = sadd.s32 %s322, %s323
          %s325 = smul.addr %s324, 8
          %s326 = scalar_lea.vmem %s0, %s325
        $region44: #{tpu_custom_call.1} parent=39 // pred_fallthru
          _
        // Predicated region
        $region45: #{tpu_custom_call.1} parent=39 // pred_check
          %p327 = pneg %p89
        $region46: #{tpu_custom_call.1} parent=39 // pred_check_branch
          %329 = sbr.rel (%p327) target = $region48
        $region47: #{tpu_custom_call.1} parent=39 // pred_region
          %p330 = scmp.lt.s32.totalorder %s29, 1
          %s331 = scalar_select %p330, %s29, 1
          %s332 = smul.addr %s331, 16
          %s333 = smul.addr %s332, 8
          %s334 = scalar_lea.vmem %s1, %s333
        $region48: #{tpu_custom_call.1} parent=39 // pred_fallthru
          _
      $region40: #{tpu_custom_call.1} parent=5 // pred_fallthru
        _
      %p335 = scmp.le.s32.totalorder 1, %s22
      %p336 = scmp.lt.s32.totalorder %s22, 3
      %p337 = pnand %p335, %p336
      %p338 = pneg %p337
      // Predicated region
      $region49: #{tpu_custom_call.1} parent=5 // pred_check
        _
      $region50: #{tpu_custom_call.1} parent=5 // pred_check_branch
        %340 = sbr.rel (%p337) target = $region52
      $region51: #{tpu_custom_call.1} parent=5 // pred_region
        %s341 = ssub.s32 %s22, 1
        %p342 = scmp.lt.s32.totalorder %s32, 1
        %s343 = scalar_select %p342, %s32, 1
        %p344 = scmp.lt.s32.totalorder %s33, 15
        %s345 = scalar_select %p344, %s33, 15
        %s346 = smul.addr %s343, 16
        %s347 = sadd.s32 %s345, %s346
        %s348 = smul.addr %s347, 8
        %s349 = scalar_lea.vmem %s0, %s348
        %p350 = pneg %p69
        %p351 = pneg %p66
        %p352 = scmp.lt.s32.totalorder %s32, 1
        %s353 = scalar_select %p352, %s32, 1
        %s354 = smul.addr %s353, 16
        %s355 = smul.addr %s354, 8
        %s356 = scalar_lea.vmem %s1, %s355
        %p357 = pneg %p95
        %p358 = pneg %p92
        %p359 = pneg %p116
        %p360 = pneg %p113
        %p361 = pneg %p137
        %p362 = pneg %p134
        %p363 = pneg %p158
        %p364 = pneg %p155
        %p365 = pneg %p179
        %p366 = pneg %p176
        %p367 = pneg %p200
        %p368 = pneg %p197
        %p369 = pneg %p221
        %p370 = pneg %p218
        %p371 = pneg %p249
        %p372 = pneg %p246
        %s373 = sand.u32 %s236, 1
        %s374 = scalar_lea.sflag [#allocation4], %s373
        %s375 = sand.u32 %s236, 1
        %s376 = smul.addr %s375, 8
        %s377 = scalar_lea.vmem [#allocation3], %s376
        %p378 = pneg %p279
        %p379 = pneg %p276
        %s380 = sand.u32 %s266, 1
        %s381 = scalar_lea.sflag [#allocation6], %s380
        %s382 = sand.u32 %s266, 1
        %s383 = smul.addr %s382, 32
        %s384 = scalar_lea.vmem [#allocation5], %s383
        %p385 = scmp.lt.s32.totalorder %s32, 1
        %s386 = scalar_select %p385, %s32, 1
        %p387 = scmp.lt.s32.totalorder %s33, 15
        %s388 = scalar_select %p387, %s33, 15
        %s389 = smul.addr %s386, 16
        %s390 = sadd.s32 %s388, %s389
        %s391 = smul.addr %s390, 8
        %s392 = scalar_lea.vmem %s0, %s391
        %p393 = scmp.lt.s32.totalorder %s32, 1
        %s394 = scalar_select %p393, %s32, 1
        %s395 = smul.addr %s394, 16
        %s396 = smul.addr %s395, 8
        %s397 = scalar_lea.vmem %s1, %s396
        %s398 = smul.u32 4, %s34
        %p399 = scmp.eq.s32.totalorder %s34, 0
        // Predicated region
        $region53: #{tpu_custom_call.1} parent=51 // pred_check
          %p400 = pneg %p399
        $region54: #{tpu_custom_call.1} parent=51 // pred_check_branch
          %402 = sbr.rel (%p400) target = $region56
        $region55: #{tpu_custom_call.1} parent=51 // pred_region
          %v403 = vld [vmem:[%s7] sm:$0x1]
          %v405 = vperm.slane %v403, 0
          %vm407 = vcmask 261120
          %408 = vst.msk [vmem:[#allocation2] sm:$0xff] %vm407, %v405
        $region56: #{tpu_custom_call.1} parent=51 // pred_fallthru
          _
        %v409 = vld [vmem:[%s392] sm:$0xff]
        %v410 = vld [vmem:[%s397] sm:$0xff]
        %v411 = vld [vmem:[%s397 + $0x8] sm:$0xff]
        %v412 = vld [vmem:[%s397 + $0x10] sm:$0xff]
        %v413 = vld [vmem:[%s397 + $0x18] sm:$0xff]
        %v414 = vld [vmem:[%s397 + $0x20] sm:$0xff]
        %v415 = vld [vmem:[%s397 + $0x28] sm:$0xff]
        %v416 = vld [vmem:[%s397 + $0x30] sm:$0xff]
        %v417 = vld [vmem:[%s397 + $0x38] sm:$0xff]
        %v418 = vld [vmem:[%s397 + $0x40] sm:$0xff]
        %v419 = vld [vmem:[%s397 + $0x48] sm:$0xff]
        %v420 = vld [vmem:[%s397 + $0x50] sm:$0xff]
        %v421 = vld [vmem:[%s397 + $0x58] sm:$0xff]
        %v422 = vld [vmem:[%s397 + $0x60] sm:$0xff]
        %v423 = vld [vmem:[%s397 + $0x68] sm:$0xff]
        %v424 = vld [vmem:[%s397 + $0x70] sm:$0xff]
        %v425 = vld [vmem:[%s397 + $0x78] sm:$0xff]
        %s426 = smul.u32 %s34, 32
        %s427 = scalar_lea.vmem %s2, %s426
        %v428 = vld [vmem:[%s427] sm:$0xff]
        %v429 = vld [vmem:[%s427 + $0x8] sm:$0xff]
        %v430 = vld [vmem:[%s427 + $0x10] sm:$0xff]
        %v431 = vld [vmem:[%s427 + $0x18] sm:$0xff]
        %s432 = scalar_lea.vmem %s4, %s426
        %v433 = vld [vmem:[%s432] sm:$0xff]
        %v434 = vld [vmem:[%s432 + $0x8] sm:$0xff]
        %v435 = vld [vmem:[%s432 + $0x10] sm:$0xff]
        %v436 = vld [vmem:[%s432 + $0x18] sm:$0xff]
        %s437 = scalar_lea.vmem %s6, %s426
        %v438 = vld [vmem:[%s437] sm:$0xff]
        %v439 = vld [vmem:[%s437 + $0x8] sm:$0xff]
        %v440 = vld [vmem:[%s437 + $0x10] sm:$0xff]
        %v441 = vld [vmem:[%s437 + $0x18] sm:$0xff]
        %s442 = scalar_lea.vmem %s3, %s34
        %v443 = vld [vmem:[%s442] sm:$0x1]
        %v445 = vperm.slane %v443, 0
        %vm447 = vcmask 261120
        %v449 = vsel %vm447, %v409, 0
        %451 = vmatpush.msra.mxu0 0.0
        %452 = vmatpush.msra.mxu0 0.0
        %453 = vmatpush.msra.mxu0 0.0
        %454 = vmatpush.msra.mxu0 0.0
        %455 = vmatpush.msra.mxu0 0.0
        %456 = vmatpush.msra.mxu0 0.0
        %457 = vmatpush.msra.mxu0 0.0
        %458 = vmatpush.msra.mxu0 0.0
        %459 = vmatpush.msra.mxu0 0.0
        %460 = vmatpush.msra.mxu0 0.0
        %461 = vmatpush.msra.mxu0 0.0
        %462 = vmatpush.msra.mxu0 0.0
        %463 = vmatpush.msra.mxu0 %v431
        %464 = vmatpush.msra.mxu0 %v430
        %465 = vmatpush.msra.mxu0 %v429
        %466 = vmatpush.msra.mxu0 %v428
        %467 = vmatmul.f32.gmra.mxu0 %v449
        %v468 = vpop.f32.mrf.mxu0
        %v469 = vadd.f32 %v445, %v468
        %470 = vdwg.mxu0
        %s471 = scalar_lea.vmem %s5, %s34
        %v472 = vld [vmem:[%s471] sm:$0x1]
        %v474 = vperm.slane %v472, 0
        %v477 = vsel %vm447, %v410, 0
        %v480 = vsel %vm447, %v411, 0
        %v483 = vsel %vm447, %v412, 0
        %v486 = vsel %vm447, %v413, 0
        %v489 = vsel %vm447, %v414, 0
        %v492 = vsel %vm447, %v415, 0
        %v495 = vsel %vm447, %v416, 0
        %v498 = vsel %vm447, %v417, 0
        %v501 = vsel %vm447, %v418, 0
        %v504 = vsel %vm447, %v419, 0
        %v507 = vsel %vm447, %v420, 0
        %v510 = vsel %vm447, %v421, 0
        %v513 = vsel %vm447, %v422, 0
        %v516 = vsel %vm447, %v423, 0
        %v519 = vsel %vm447, %v424, 0
        %v522 = vsel %vm447, %v425, 0
        %524 = vmatpush.msra.mxu0 0.0
        %525 = vmatpush.msra.mxu0 0.0
        %526 = vmatpush.msra.mxu0 0.0
        %527 = vmatpush.msra.mxu0 0.0
        %528 = vmatpush.msra.mxu0 0.0
        %529 = vmatpush.msra.mxu0 0.0
        %530 = vmatpush.msra.mxu0 0.0
        %531 = vmatpush.msra.mxu0 0.0
        %532 = vmatpush.msra.mxu0 0.0
        %533 = vmatpush.msra.mxu0 0.0
        %534 = vmatpush.msra.mxu0 0.0
        %535 = vmatpush.msra.mxu0 0.0
        %536 = vmatpush.msra.mxu0 %v436
        %537 = vmatpush.msra.mxu0 %v435
        %538 = vmatpush.msra.mxu0 %v434
        %539 = vmatpush.msra.mxu0 %v433
        %540 = vmatmul.f32.gmra.mxu0 %v477
        %v541 = vpop.f32.mrf.mxu0
        %v542 = vadd.f32 %v474, %v541
        %543 = vmatmul.f32.gmra.mxu0 %v480
        %v544 = vpop.f32.mrf.mxu0
        %v545 = vadd.f32 %v474, %v544
        %546 = vmatmul.f32.gmra.mxu0 %v483
        %v547 = vpop.f32.mrf.mxu0
        %v548 = vadd.f32 %v474, %v547
        %549 = vmatmul.f32.gmra.mxu0 %v486
        %v550 = vpop.f32.mrf.mxu0
        %v551 = vadd.f32 %v474, %v550
        %552 = vmatmul.f32.gmra.mxu0 %v489
        %v553 = vpop.f32.mrf.mxu0
        %v554 = vadd.f32 %v474, %v553
        %555 = vmatmul.f32.gmra.mxu0 %v492
        %v556 = vpop.f32.mrf.mxu0
        %v557 = vadd.f32 %v474, %v556
        %558 = vmatmul.f32.gmra.mxu0 %v495
        %v559 = vpop.f32.mrf.mxu0
        %v560 = vadd.f32 %v474, %v559
        %561 = vmatmul.f32.gmra.mxu0 %v498
        %v562 = vpop.f32.mrf.mxu0
        %v563 = vadd.f32 %v474, %v562
        %564 = vmatmul.f32.gmra.mxu0 %v501
        %v565 = vpop.f32.mrf.mxu0
        %v566 = vadd.f32 %v474, %v565
        %567 = vmatmul.f32.gmra.mxu0 %v504
        %v568 = vpop.f32.mrf.mxu0
        %v569 = vadd.f32 %v474, %v568
        %570 = vmatmul.f32.gmra.mxu0 %v507
        %v571 = vpop.f32.mrf.mxu0
        %v572 = vadd.f32 %v474, %v571
        %573 = vmatmul.f32.gmra.mxu0 %v510
        %v574 = vpop.f32.mrf.mxu0
        %v575 = vadd.f32 %v474, %v574
        %576 = vmatmul.f32.gmra.mxu0 %v513
        %v577 = vpop.f32.mrf.mxu0
        %v578 = vadd.f32 %v474, %v577
        %579 = vmatmul.f32.gmra.mxu0 %v516
        %v580 = vpop.f32.mrf.mxu0
        %v581 = vadd.f32 %v474, %v580
        %582 = vmatmul.f32.gmra.mxu0 %v519
        %v583 = vpop.f32.mrf.mxu0
        %v584 = vadd.f32 %v474, %v583
        %585 = vmatmul.f32.gmra.mxu0 %v522
        %v586 = vpop.f32.mrf.mxu0
        %v587 = vadd.f32 %v474, %v586
        %588 = vdwg.mxu0
        %v589 = vlaneseq
        %v590 = vand.u32 %v589, 127
        %vm591 = vcmp.lt.s32.totalorder %v590, 8
        %vm592 = vcmask 64512
        %v594 = vsel %vm592, %v469, 0
        %v597 = vsel %vm592, %v542, 0
        %v600 = vsel %vm592, %v545, 0
        %v603 = vsel %vm592, %v548, 0
        %v606 = vsel %vm592, %v551, 0
        %v609 = vsel %vm592, %v554, 0
        %v612 = vsel %vm592, %v557, 0
        %v615 = vsel %vm592, %v560, 0
        %v618 = vsel %vm592, %v563, 0
        %v621 = vsel %vm592, %v566, 0
        %v624 = vsel %vm592, %v569, 0
        %v627 = vsel %vm592, %v572, 0
        %v630 = vsel %vm592, %v575, 0
        %v633 = vsel %vm592, %v578, 0
        %v636 = vsel %vm592, %v581, 0
        %v639 = vsel %vm592, %v584, 0
        %v642 = vsel %vm592, %v587, 0
        %644 = vmatpush.xpose.msra.mxu0 %v642
        %645 = vmatpush.xpose.msra.mxu0 %v639
        %646 = vmatpush.xpose.msra.mxu0 %v636
        %647 = vmatpush.xpose.msra.mxu0 %v633
        %648 = vmatpush.xpose.msra.mxu0 %v630
        %649 = vmatpush.xpose.msra.mxu0 %v627
        %650 = vmatpush.xpose.msra.mxu0 %v624
        %651 = vmatpush.xpose.msra.mxu0 %v621
        %652 = vmatpush.xpose.msra.mxu0 %v618
        %653 = vmatpush.xpose.msra.mxu0 %v615
        %654 = vmatpush.xpose.msra.mxu0 %v612
        %655 = vmatpush.xpose.msra.mxu0 %v609
        %656 = vmatpush.xpose.msra.mxu0 %v606
        %657 = vmatpush.xpose.msra.mxu0 %v603
        %658 = vmatpush.xpose.msra.mxu0 %v600
        %659 = vmatpush.xpose.msra.mxu0 %v597
        %660 = vmatmul.f32.gmra.mxu0 %v594
        %v661 = vpop.f32.mrf.mxu0
        %v662 = vadd.f32 0.0, %v661
        %663 = vdwg.mxu0
        %v664 = vsel %vm591, %v662, -1e+30
        %665 = vmax.xlane.f32.xlu0 %v664
        %v666 = vpop.xlane.xlu0 %665
        %v667 = vsub.f32 %v664, %v666
        %v668 = vmul.f32 %v667, 1.442695
        %v669 = vpow.pop %v668
        %670 = vadd.xlane.f32.xlu0 %v669
        %v671 = vpop.xlane.xlu0 %670
        %v672 = vrcp.pop %v671
        %v673 = vmul.f32 %v669, %v672
        %674 = vst [vmem:[%s384] sm:$0xff] %v673
        %675 = vrot.lane.b32.xlu0 %v542, 96
        %v676 = vpop.permute.xlu0 %675
        %677 = vrot.lane.b32.xlu0 %v545, 96
        %v678 = vpop.permute.xlu0 %677
        %679 = vrot.lane.b32.xlu0 %v548, 96
        %v680 = vpop.permute.xlu0 %679
        %681 = vrot.lane.b32.xlu0 %v551, 96
        %v682 = vpop.permute.xlu0 %681
        %683 = vrot.lane.b32.xlu0 %v554, 96
        %v684 = vpop.permute.xlu0 %683
        %685 = vrot.lane.b32.xlu0 %v557, 96
        %v686 = vpop.permute.xlu0 %685
        %687 = vrot.lane.b32.xlu0 %v560, 96
        %v688 = vpop.permute.xlu0 %687
        %689 = vrot.lane.b32.xlu0 %v563, 96
        %v690 = vpop.permute.xlu0 %689
        %691 = vrot.lane.b32.xlu0 %v566, 96
        %v692 = vpop.permute.xlu0 %691
        %693 = vrot.lane.b32.xlu0 %v569, 96
        %v694 = vpop.permute.xlu0 %693
        %695 = vrot.lane.b32.xlu0 %v572, 96
        %v696 = vpop.permute.xlu0 %695
        %697 = vrot.lane.b32.xlu0 %v575, 96
        %v698 = vpop.permute.xlu0 %697
        %699 = vrot.lane.b32.xlu0 %v578, 96
        %v700 = vpop.permute.xlu0 %699
        %701 = vrot.lane.b32.xlu0 %v581, 96
        %v702 = vpop.permute.xlu0 %701
        %703 = vrot.lane.b32.xlu0 %v584, 96
        %v704 = vpop.permute.xlu0 %703
        %705 = vrot.lane.b32.xlu0 %v587, 96
        %v706 = vpop.permute.xlu0 %705
        %723 = vmatpush.msra.mxu0 %v706
        %724 = vmatpush.msra.mxu0 %v704
        %725 = vmatpush.msra.mxu0 %v702
        %726 = vmatpush.msra.mxu0 %v700
        %727 = vmatpush.msra.mxu0 %v698
        %728 = vmatpush.msra.mxu0 %v696
        %729 = vmatpush.msra.mxu0 %v694
        %730 = vmatpush.msra.mxu0 %v692
        %731 = vmatpush.msra.mxu0 %v690
        %732 = vmatpush.msra.mxu0 %v688
        %733 = vmatpush.msra.mxu0 %v686
        %734 = vmatpush.msra.mxu0 %v684
        %735 = vmatpush.msra.mxu0 %v682
        %736 = vmatpush.msra.mxu0 %v680
        %737 = vmatpush.msra.mxu0 %v678
        %738 = vmatpush.msra.mxu0 %v676
        %739 = vmatmul.f32.gmra.mxu0 %v673
        %v740 = vpop.f32.mrf.mxu0
        %v741 = vadd.f32 0.0, %v740
        %742 = vdwg.mxu0
        %743 = vrot.lane.b32.xlu0 %v469, 120
        %v744 = vpop.permute.xlu0 %743
        %745 = vrot.lane.b32.xlu0 %v542, 120
        %v746 = vpop.permute.xlu0 %745
        %747 = vrot.lane.b32.xlu0 %v545, 120
        %v748 = vpop.permute.xlu0 %747
        %749 = vrot.lane.b32.xlu0 %v548, 120
        %v750 = vpop.permute.xlu0 %749
        %751 = vrot.lane.b32.xlu0 %v551, 120
        %v752 = vpop.permute.xlu0 %751
        %753 = vrot.lane.b32.xlu0 %v554, 120
        %v754 = vpop.permute.xlu0 %753
        %755 = vrot.lane.b32.xlu0 %v557, 120
        %v756 = vpop.permute.xlu0 %755
        %757 = vrot.lane.b32.xlu0 %v560, 120
        %v758 = vpop.permute.xlu0 %757
        %759 = vrot.lane.b32.xlu0 %v563, 120
        %v760 = vpop.permute.xlu0 %759
        %761 = vrot.lane.b32.xlu0 %v566, 120
        %v762 = vpop.permute.xlu0 %761
        %763 = vrot.lane.b32.xlu0 %v569, 120
        %v764 = vpop.permute.xlu0 %763
        %765 = vrot.lane.b32.xlu0 %v572, 120
        %v766 = vpop.permute.xlu0 %765
        %767 = vrot.lane.b32.xlu0 %v575, 120
        %v768 = vpop.permute.xlu0 %767
        %769 = vrot.lane.b32.xlu0 %v578, 120
        %v770 = vpop.permute.xlu0 %769
        %771 = vrot.lane.b32.xlu0 %v581, 120
        %v772 = vpop.permute.xlu0 %771
        %773 = vrot.lane.b32.xlu0 %v584, 120
        %v774 = vpop.permute.xlu0 %773
        %775 = vrot.lane.b32.xlu0 %v587, 120
        %v776 = vpop.permute.xlu0 %775
        %v777 = vsel %vm592, %v744, 0
        %v779 = vsel %vm592, %v746, 0
        %v781 = vsel %vm592, %v748, 0
        %v783 = vsel %vm592, %v750, 0
        %v785 = vsel %vm592, %v752, 0
        %v787 = vsel %vm592, %v754, 0
        %v789 = vsel %vm592, %v756, 0
        %v791 = vsel %vm592, %v758, 0
        %v793 = vsel %vm592, %v760, 0
        %v795 = vsel %vm592, %v762, 0
        %v797 = vsel %vm592, %v764, 0
        %v799 = vsel %vm592, %v766, 0
        %v801 = vsel %vm592, %v768, 0
        %v803 = vsel %vm592, %v770, 0
        %v805 = vsel %vm592, %v772, 0
        %v807 = vsel %vm592, %v774, 0
        %v809 = vsel %vm592, %v776, 0
        %811 = vmatpush.xpose.msra.mxu0 %v809
        %812 = vmatpush.xpose.msra.mxu0 %v807
        %813 = vmatpush.xpose.msra.mxu0 %v805
        %814 = vmatpush.xpose.msra.mxu0 %v803
        %815 = vmatpush.xpose.msra.mxu0 %v801
        %816 = vmatpush.xpose.msra.mxu0 %v799
        %817 = vmatpush.xpose.msra.mxu0 %v797
        %818 = vmatpush.xpose.msra.mxu0 %v795
        %819 = vmatpush.xpose.msra.mxu0 %v793
        %820 = vmatpush.xpose.msra.mxu0 %v791
        %821 = vmatpush.xpose.msra.mxu0 %v789
        %822 = vmatpush.xpose.msra.mxu0 %v787
        %823 = vmatpush.xpose.msra.mxu0 %v785
        %824 = vmatpush.xpose.msra.mxu0 %v783
        %825 = vmatpush.xpose.msra.mxu0 %v781
        %826 = vmatpush.xpose.msra.mxu0 %v779
        %827 = vmatmul.f32.gmra.mxu0 %v777
        %v828 = vpop.f32.mrf.mxu0
        %v829 = vadd.f32 0.0, %v828
        %830 = vdwg.mxu0
        %v831 = vsel %vm591, %v829, -1e+30
        %832 = vmax.xlane.f32.xlu0 %v831
        %v833 = vpop.xlane.xlu0 %832
        %v834 = vsub.f32 %v831, %v833
        %v835 = vmul.f32 %v834, 1.442695
        %v836 = vpow.pop %v835
        %837 = vadd.xlane.f32.xlu0 %v836
        %v838 = vpop.xlane.xlu0 %837
        %v839 = vrcp.pop %v838
        %v840 = vmul.f32 %v836, %v839
        %s841 = scalar_lea.vmem %s384, 8 [#allocation5]
        %842 = vst [vmem:[%s841] sm:$0xff] %v840
        %843 = vrot.lane.b32.xlu0 %v542, 88
        %v844 = vpop.permute.xlu0 %843
        %845 = vrot.lane.b32.xlu0 %v545, 88
        %v846 = vpop.permute.xlu0 %845
        %847 = vrot.lane.b32.xlu0 %v548, 88
        %v848 = vpop.permute.xlu0 %847
        %849 = vrot.lane.b32.xlu0 %v551, 88
        %v850 = vpop.permute.xlu0 %849
        %851 = vrot.lane.b32.xlu0 %v554, 88
        %v852 = vpop.permute.xlu0 %851
        %853 = vrot.lane.b32.xlu0 %v557, 88
        %v854 = vpop.permute.xlu0 %853
        %855 = vrot.lane.b32.xlu0 %v560, 88
        %v856 = vpop.permute.xlu0 %855
        %857 = vrot.lane.b32.xlu0 %v563, 88
        %v858 = vpop.permute.xlu0 %857
        %859 = vrot.lane.b32.xlu0 %v566, 88
        %v860 = vpop.permute.xlu0 %859
        %861 = vrot.lane.b32.xlu0 %v569, 88
        %v862 = vpop.permute.xlu0 %861
        %863 = vrot.lane.b32.xlu0 %v572, 88
        %v864 = vpop.permute.xlu0 %863
        %865 = vrot.lane.b32.xlu0 %v575, 88
        %v866 = vpop.permute.xlu0 %865
        %867 = vrot.lane.b32.xlu0 %v578, 88
        %v868 = vpop.permute.xlu0 %867
        %869 = vrot.lane.b32.xlu0 %v581, 88
        %v870 = vpop.permute.xlu0 %869
        %871 = vrot.lane.b32.xlu0 %v584, 88
        %v872 = vpop.permute.xlu0 %871
        %873 = vrot.lane.b32.xlu0 %v587, 88
        %v874 = vpop.permute.xlu0 %873
        %891 = vmatpush.msra.mxu0 %v874
        %892 = vmatpush.msra.mxu0 %v872
        %893 = vmatpush.msra.mxu0 %v870
        %894 = vmatpush.msra.mxu0 %v868
        %895 = vmatpush.msra.mxu0 %v866
        %896 = vmatpush.msra.mxu0 %v864
        %897 = vmatpush.msra.mxu0 %v862
        %898 = vmatpush.msra.mxu0 %v860
        %899 = vmatpush.msra.mxu0 %v858
        %900 = vmatpush.msra.mxu0 %v856
        %901 = vmatpush.msra.mxu0 %v854
        %902 = vmatpush.msra.mxu0 %v852
        %903 = vmatpush.msra.mxu0 %v850
        %904 = vmatpush.msra.mxu0 %v848
        %905 = vmatpush.msra.mxu0 %v846
        %906 = vmatpush.msra.mxu0 %v844
        %907 = vmatmul.f32.gmra.mxu0 %v840
        %v908 = vpop.f32.mrf.mxu0
        %v909 = vadd.f32 0.0, %v908
        %910 = vdwg.mxu0
        %911 = vrot.lane.b32.xlu0 %v469, 112
        %v912 = vpop.permute.xlu0 %911
        %913 = vrot.lane.b32.xlu0 %v542, 112
        %v914 = vpop.permute.xlu0 %913
        %915 = vrot.lane.b32.xlu0 %v545, 112
        %v916 = vpop.permute.xlu0 %915
        %917 = vrot.lane.b32.xlu0 %v548, 112
        %v918 = vpop.permute.xlu0 %917
        %919 = vrot.lane.b32.xlu0 %v551, 112
        %v920 = vpop.permute.xlu0 %919
        %921 = vrot.lane.b32.xlu0 %v554, 112
        %v922 = vpop.permute.xlu0 %921
        %923 = vrot.lane.b32.xlu0 %v557, 112
        %v924 = vpop.permute.xlu0 %923
        %925 = vrot.lane.b32.xlu0 %v560, 112
        %v926 = vpop.permute.xlu0 %925
        %927 = vrot.lane.b32.xlu0 %v563, 112
        %v928 = vpop.permute.xlu0 %927
        %929 = vrot.lane.b32.xlu0 %v566, 112
        %v930 = vpop.permute.xlu0 %929
        %931 = vrot.lane.b32.xlu0 %v569, 112
        %v932 = vpop.permute.xlu0 %931
        %933 = vrot.lane.b32.xlu0 %v572, 112
        %v934 = vpop.permute.xlu0 %933
        %935 = vrot.lane.b32.xlu0 %v575, 112
        %v936 = vpop.permute.xlu0 %935
        %937 = vrot.lane.b32.xlu0 %v578, 112
        %v938 = vpop.permute.xlu0 %937
        %939 = vrot.lane.b32.xlu0 %v581, 112
        %v940 = vpop.permute.xlu0 %939
        %941 = vrot.lane.b32.xlu0 %v584, 112
        %v942 = vpop.permute.xlu0 %941
        %943 = vrot.lane.b32.xlu0 %v587, 112
        %v944 = vpop.permute.xlu0 %943
        %v945 = vsel %vm592, %v912, 0
        %v947 = vsel %vm592, %v914, 0
        %v949 = vsel %vm592, %v916, 0
        %v951 = vsel %vm592, %v918, 0
        %v953 = vsel %vm592, %v920, 0
        %v955 = vsel %vm592, %v922, 0
        %v957 = vsel %vm592, %v924, 0
        %v959 = vsel %vm592, %v926, 0
        %v961 = vsel %vm592, %v928, 0
        %v963 = vsel %vm592, %v930, 0
        %v965 = vsel %vm592, %v932, 0
        %v967 = vsel %vm592, %v934, 0
        %v969 = vsel %vm592, %v936, 0
        %v971 = vsel %vm592, %v938, 0
        %v973 = vsel %vm592, %v940, 0
        %v975 = vsel %vm592, %v942, 0
        %v977 = vsel %vm592, %v944, 0
        %979 = vmatpush.xpose.msra.mxu0 %v977
        %980 = vmatpush.xpose.msra.mxu0 %v975
        %981 = vmatpush.xpose.msra.mxu0 %v973
        %982 = vmatpush.xpose.msra.mxu0 %v971
        %983 = vmatpush.xpose.msra.mxu0 %v969
        %984 = vmatpush.xpose.msra.mxu0 %v967
        %985 = vmatpush.xpose.msra.mxu0 %v965
        %986 = vmatpush.xpose.msra.mxu0 %v963
        %987 = vmatpush.xpose.msra.mxu0 %v961
        %988 = vmatpush.xpose.msra.mxu0 %v959
        %989 = vmatpush.xpose.msra.mxu0 %v957
        %990 = vmatpush.xpose.msra.mxu0 %v955
        %991 = vmatpush.xpose.msra.mxu0 %v953
        %992 = vmatpush.xpose.msra.mxu0 %v951
        %993 = vmatpush.xpose.msra.mxu0 %v949
        %994 = vmatpush.xpose.msra.mxu0 %v947
        %995 = vmatmul.f32.gmra.mxu0 %v945
        %v996 = vpop.f32.mrf.mxu0
        %v997 = vadd.f32 0.0, %v996
        %998 = vdwg.mxu0
        %v999 = vsel %vm591, %v997, -1e+30
        %1000 = vmax.xlane.f32.xlu0 %v999
        %v1001 = vpop.xlane.xlu0 %1000
        %v1002 = vsub.f32 %v999, %v1001
        %v1003 = vmul.f32 %v1002, 1.442695
        %v1004 = vpow.pop %v1003
        %1005 = vadd.xlane.f32.xlu0 %v1004
        %v1006 = vpop.xlane.xlu0 %1005
        %v1007 = vrcp.pop %v1006
        %v1008 = vmul.f32 %v1004, %v1007
        %s1009 = scalar_lea.vmem %s384, 16 [#allocation5]
        %1010 = vst [vmem:[%s1009] sm:$0xff] %v1008
        %1011 = vrot.lane.b32.xlu0 %v542, 80
        %v1012 = vpop.permute.xlu0 %1011
        %1013 = vrot.lane.b32.xlu0 %v545, 80
        %v1014 = vpop.permute.xlu0 %1013
        %1015 = vrot.lane.b32.xlu0 %v548, 80
        %v1016 = vpop.permute.xlu0 %1015
        %1017 = vrot.lane.b32.xlu0 %v551, 80
        %v1018 = vpop.permute.xlu0 %1017
        %1019 = vrot.lane.b32.xlu0 %v554, 80
        %v1020 = vpop.permute.xlu0 %1019
        %1021 = vrot.lane.b32.xlu0 %v557, 80
        %v1022 = vpop.permute.xlu0 %1021
        %1023 = vrot.lane.b32.xlu0 %v560, 80
        %v1024 = vpop.permute.xlu0 %1023
        %1025 = vrot.lane.b32.xlu0 %v563, 80
        %v1026 = vpop.permute.xlu0 %1025
        %1027 = vrot.lane.b32.xlu0 %v566, 80
        %v1028 = vpop.permute.xlu0 %1027
        %1029 = vrot.lane.b32.xlu0 %v569, 80
        %v1030 = vpop.permute.xlu0 %1029
        %1031 = vrot.lane.b32.xlu0 %v572, 80
        %v1032 = vpop.permute.xlu0 %1031
        %1033 = vrot.lane.b32.xlu0 %v575, 80
        %v1034 = vpop.permute.xlu0 %1033
        %1035 = vrot.lane.b32.xlu0 %v578, 80
        %v1036 = vpop.permute.xlu0 %1035
        %1037 = vrot.lane.b32.xlu0 %v581, 80
        %v1038 = vpop.permute.xlu0 %1037
        %1039 = vrot.lane.b32.xlu0 %v584, 80
        %v1040 = vpop.permute.xlu0 %1039
        %1041 = vrot.lane.b32.xlu0 %v587, 80
        %v1042 = vpop.permute.xlu0 %1041
        %1059 = vmatpush.msra.mxu0 %v1042
        %1060 = vmatpush.msra.mxu0 %v1040
        %1061 = vmatpush.msra.mxu0 %v1038
        %1062 = vmatpush.msra.mxu0 %v1036
        %1063 = vmatpush.msra.mxu0 %v1034
        %1064 = vmatpush.msra.mxu0 %v1032
        %1065 = vmatpush.msra.mxu0 %v1030
        %1066 = vmatpush.msra.mxu0 %v1028
        %1067 = vmatpush.msra.mxu0 %v1026
        %1068 = vmatpush.msra.mxu0 %v1024
        %1069 = vmatpush.msra.mxu0 %v1022
        %1070 = vmatpush.msra.mxu0 %v1020
        %1071 = vmatpush.msra.mxu0 %v1018
        %1072 = vmatpush.msra.mxu0 %v1016
        %1073 = vmatpush.msra.mxu0 %v1014
        %1074 = vmatpush.msra.mxu0 %v1012
        %1075 = vmatmul.f32.gmra.mxu0 %v1008
        %v1076 = vpop.f32.mrf.mxu0
        %v1077 = vadd.f32 0.0, %v1076
        %1078 = vdwg.mxu0
        %1079 = vrot.lane.b32.xlu0 %v469, 104
        %v1080 = vpop.permute.xlu0 %1079
        %1081 = vrot.lane.b32.xlu0 %v542, 104
        %v1082 = vpop.permute.xlu0 %1081
        %1083 = vrot.lane.b32.xlu0 %v545, 104
        %v1084 = vpop.permute.xlu0 %1083
        %1085 = vrot.lane.b32.xlu0 %v548, 104
        %v1086 = vpop.permute.xlu0 %1085
        %1087 = vrot.lane.b32.xlu0 %v551, 104
        %v1088 = vpop.permute.xlu0 %1087
        %1089 = vrot.lane.b32.xlu0 %v554, 104
        %v1090 = vpop.permute.xlu0 %1089
        %1091 = vrot.lane.b32.xlu0 %v557, 104
        %v1092 = vpop.permute.xlu0 %1091
        %1093 = vrot.lane.b32.xlu0 %v560, 104
        %v1094 = vpop.permute.xlu0 %1093
        %1095 = vrot.lane.b32.xlu0 %v563, 104
        %v1096 = vpop.permute.xlu0 %1095
        %1097 = vrot.lane.b32.xlu0 %v566, 104
        %v1098 = vpop.permute.xlu0 %1097
        %1099 = vrot.lane.b32.xlu0 %v569, 104
        %v1100 = vpop.permute.xlu0 %1099
        %1101 = vrot.lane.b32.xlu0 %v572, 104
        %v1102 = vpop.permute.xlu0 %1101
        %1103 = vrot.lane.b32.xlu0 %v575, 104
        %v1104 = vpop.permute.xlu0 %1103
        %1105 = vrot.lane.b32.xlu0 %v578, 104
        %v1106 = vpop.permute.xlu0 %1105
        %1107 = vrot.lane.b32.xlu0 %v581, 104
        %v1108 = vpop.permute.xlu0 %1107
        %1109 = vrot.lane.b32.xlu0 %v584, 104
        %v1110 = vpop.permute.xlu0 %1109
        %1111 = vrot.lane.b32.xlu0 %v587, 104
        %v1112 = vpop.permute.xlu0 %1111
        %v1113 = vsel %vm592, %v1080, 0
        %v1115 = vsel %vm592, %v1082, 0
        %v1117 = vsel %vm592, %v1084, 0
        %v1119 = vsel %vm592, %v1086, 0
        %v1121 = vsel %vm592, %v1088, 0
        %v1123 = vsel %vm592, %v1090, 0
        %v1125 = vsel %vm592, %v1092, 0
        %v1127 = vsel %vm592, %v1094, 0
        %v1129 = vsel %vm592, %v1096, 0
        %v1131 = vsel %vm592, %v1098, 0
        %v1133 = vsel %vm592, %v1100, 0
        %v1135 = vsel %vm592, %v1102, 0
        %v1137 = vsel %vm592, %v1104, 0
        %v1139 = vsel %vm592, %v1106, 0
        %v1141 = vsel %vm592, %v1108, 0
        %v1143 = vsel %vm592, %v1110, 0
        %v1145 = vsel %vm592, %v1112, 0
        %1147 = vmatpush.xpose.msra.mxu0 %v1145
        %1148 = vmatpush.xpose.msra.mxu0 %v1143
        %1149 = vmatpush.xpose.msra.mxu0 %v1141
        %1150 = vmatpush.xpose.msra.mxu0 %v1139
        %1151 = vmatpush.xpose.msra.mxu0 %v1137
        %1152 = vmatpush.xpose.msra.mxu0 %v1135
        %1153 = vmatpush.xpose.msra.mxu0 %v1133
        %1154 = vmatpush.xpose.msra.mxu0 %v1131
        %1155 = vmatpush.xpose.msra.mxu0 %v1129
        %1156 = vmatpush.xpose.msra.mxu0 %v1127
        %1157 = vmatpush.xpose.msra.mxu0 %v1125
        %1158 = vmatpush.xpose.msra.mxu0 %v1123
        %1159 = vmatpush.xpose.msra.mxu0 %v1121
        %1160 = vmatpush.xpose.msra.mxu0 %v1119
        %1161 = vmatpush.xpose.msra.mxu0 %v1117
        %1162 = vmatpush.xpose.msra.mxu0 %v1115
        %1163 = vmatmul.f32.gmra.mxu0 %v1113
        %v1164 = vpop.f32.mrf.mxu0
        %v1165 = vadd.f32 0.0, %v1164
        %1166 = vdwg.mxu0
        %v1167 = vsel %vm591, %v1165, -1e+30
        %1168 = vmax.xlane.f32.xlu0 %v1167
        %v1169 = vpop.xlane.xlu0 %1168
        %v1170 = vsub.f32 %v1167, %v1169
        %v1171 = vmul.f32 %v1170, 1.442695
        %v1172 = vpow.pop %v1171
        %1173 = vadd.xlane.f32.xlu0 %v1172
        %v1174 = vpop.xlane.xlu0 %1173
        %v1175 = vrcp.pop %v1174
        %v1176 = vmul.f32 %v1172, %v1175
        %s1177 = scalar_lea.vmem %s384, 24 [#allocation5]
        %1178 = vst [vmem:[%s1177] sm:$0xff] %v1176
        %1179 = vrot.lane.b32.xlu0 %v542, 72
        %v1180 = vpop.permute.xlu0 %1179
        %1181 = vrot.lane.b32.xlu0 %v545, 72
        %v1182 = vpop.permute.xlu0 %1181
        %1183 = vrot.lane.b32.xlu0 %v548, 72
        %v1184 = vpop.permute.xlu0 %1183
        %1185 = vrot.lane.b32.xlu0 %v551, 72
        %v1186 = vpop.permute.xlu0 %1185
        %1187 = vrot.lane.b32.xlu0 %v554, 72
        %v1188 = vpop.permute.xlu0 %1187
        %1189 = vrot.lane.b32.xlu0 %v557, 72
        %v1190 = vpop.permute.xlu0 %1189
        %1191 = vrot.lane.b32.xlu0 %v560, 72
        %v1192 = vpop.permute.xlu0 %1191
        %1193 = vrot.lane.b32.xlu0 %v563, 72
        %v1194 = vpop.permute.xlu0 %1193
        %1195 = vrot.lane.b32.xlu0 %v566, 72
        %v1196 = vpop.permute.xlu0 %1195
        %1197 = vrot.lane.b32.xlu0 %v569, 72
        %v1198 = vpop.permute.xlu0 %1197
        %1199 = vrot.lane.b32.xlu0 %v572, 72
        %v1200 = vpop.permute.xlu0 %1199
        %1201 = vrot.lane.b32.xlu0 %v575, 72
        %v1202 = vpop.permute.xlu0 %1201
        %1203 = vrot.lane.b32.xlu0 %v578, 72
        %v1204 = vpop.permute.xlu0 %1203
        %1205 = vrot.lane.b32.xlu0 %v581, 72
        %v1206 = vpop.permute.xlu0 %1205
        %1207 = vrot.lane.b32.xlu0 %v584, 72
        %v1208 = vpop.permute.xlu0 %1207
        %1209 = vrot.lane.b32.xlu0 %v587, 72
        %v1210 = vpop.permute.xlu0 %1209
        %1227 = vmatpush.msra.mxu0 %v1210
        %1228 = vmatpush.msra.mxu0 %v1208
        %1229 = vmatpush.msra.mxu0 %v1206
        %1230 = vmatpush.msra.mxu0 %v1204
        %1231 = vmatpush.msra.mxu0 %v1202
        %1232 = vmatpush.msra.mxu0 %v1200
        %1233 = vmatpush.msra.mxu0 %v1198
        %1234 = vmatpush.msra.mxu0 %v1196
        %1235 = vmatpush.msra.mxu0 %v1194
        %1236 = vmatpush.msra.mxu0 %v1192
        %1237 = vmatpush.msra.mxu0 %v1190
        %1238 = vmatpush.msra.mxu0 %v1188
        %1239 = vmatpush.msra.mxu0 %v1186
        %1240 = vmatpush.msra.mxu0 %v1184
        %1241 = vmatpush.msra.mxu0 %v1182
        %1242 = vmatpush.msra.mxu0 %v1180
        %1243 = vmatmul.f32.gmra.mxu0 %v1176
        %v1244 = vpop.f32.mrf.mxu0
        %v1245 = vadd.f32 0.0, %v1244
        %1246 = vdwg.mxu0
        %1248 = vrot.lane.b32.xlu0 %v909, 8
        %v1249 = vpop.permute.xlu0 %1248
        %1252 = vrot.lane.b32.xlu0 %v1077, 16
        %v1253 = vpop.permute.xlu0 %1252
        %1256 = vrot.lane.b32.xlu0 %v1245, 24
        %v1257 = vpop.permute.xlu0 %1256
        %v1259 = vsel %vm592, %v741, %v1249
        %vm1260 = vcmask 130048
        %v1261 = vsel %vm1260, %v1259, %v1253
        %vm1262 = vcmask 195584
        %v1263 = vsel %vm1262, %v1261, %v1257
        %v1264 = vld [vmem:[#allocation2] sm:$0xff]
        %v1266 = vsel %vm447, %v1263, 0
        %1268 = vmatpush.msra.mxu0 0.0
        %1269 = vmatpush.msra.mxu0 0.0
        %1270 = vmatpush.msra.mxu0 0.0
        %1271 = vmatpush.msra.mxu0 0.0
        %1272 = vmatpush.msra.mxu0 0.0
        %1273 = vmatpush.msra.mxu0 0.0
        %1274 = vmatpush.msra.mxu0 0.0
        %1275 = vmatpush.msra.mxu0 0.0
        %1276 = vmatpush.msra.mxu0 0.0
        %1277 = vmatpush.msra.mxu0 0.0
        %1278 = vmatpush.msra.mxu0 0.0
        %1279 = vmatpush.msra.mxu0 0.0
        %1280 = vmatpush.msra.mxu0 %v441
        %1281 = vmatpush.msra.mxu0 %v440
        %1282 = vmatpush.msra.mxu0 %v439
        %1283 = vmatpush.msra.mxu0 %v438
        %1284 = vmatmul.f32.gmra.mxu0 %v1266
        %v1285 = vpop.f32.mrf.mxu0
        %v1286 = vadd.f32 0.0, %v1285
        %1287 = vdwg.mxu0
        %v1288 = vadd.f32 %v1264, %v1286
        %1289 = vst.msk [vmem:[#allocation2] sm:$0xff] %vm447, %v1288
        // Predicated region
        $region57: #{tpu_custom_call.1} parent=51 // pred_check
          %p1290 = pneg %p399
        $region58: #{tpu_custom_call.1} parent=51 // pred_check_branch
          %1292 = sbr.rel (%p1290) target = $region60
        $region59: #{tpu_custom_call.1} parent=51 // pred_region
          %v1293 = vld [vmem:[#allocation2] sm:$0xff]
          %1294 = vst.msk [vmem:[%s377] sm:$0xff] %vm447, %v1293
        $region60: #{tpu_custom_call.1} parent=51 // pred_fallthru
          _
        %s1295 = sand.u32 %s236, 1
        %s1296 = scalar_lea.sflag [#allocation4], %s1295
        %s1297 = sand.u32 %s236, 1
        %s1298 = smul.addr %s1297, 8
        %s1299 = scalar_lea.vmem [#allocation3], %s1298
        %s1300 = sand.u32 %s266, 1
        %s1301 = scalar_lea.sflag [#allocation6], %s1300
        %s1302 = sand.u32 %s266, 1
        %s1303 = smul.addr %s1302, 32
        %s1304 = scalar_lea.vmem [#allocation5], %s1303
        // Predicated region
        $region61: #{tpu_custom_call.1} parent=51 // pred_check
          %p1305 = pneg %p246
        $region62: #{tpu_custom_call.1} parent=51 // pred_check_branch
          %1307 = sbr.rel (%p1305) target = $region64
        $region63: #{tpu_custom_call.1} parent=51 // pred_region
          %1309 = vsyncadd %s1296, 0
          %s1310 = sadd.s32 %s33, %s32
          %s1311 = smul.addr %s1310, 8
          %s1312 = scalar_lea.hbm %s8, %s1311
          %s1314 = sshll.u32 %s1299, 4
          %s1315 = int_to_ptr.vmem [resolvable:$true] %s1314
          %s1316 = sshll.u32 %s1312, 4
          %s1317 = int_to_ptr.hbm [resolvable:$true] %s1316
          %1319 = dma.vmem_to_hbm [thread:$0]  %s1315, 128, %s1317, %s1296
        $region64: #{tpu_custom_call.1} parent=51 // pred_fallthru
          _
        // Predicated region
        $region65: #{tpu_custom_call.1} parent=51 // pred_check
          %p1320 = pneg %p276
        $region66: #{tpu_custom_call.1} parent=51 // pred_check_branch
          %1322 = sbr.rel (%p1320) target = $region68
        $region67: #{tpu_custom_call.1} parent=51 // pred_region
          %s1323 = smul.u32 4, %s34
          %1325 = vsyncadd %s1301, 0
          %s1326 = sadd.s32 %s33, %s1323
          %s1327 = smul.addr %s32, 4
          %s1328 = sadd.s32 %s1326, %s1327
          %s1329 = smul.addr %s1328, 8
          %s1330 = scalar_lea.hbm %s9, %s1329
          %s1331 = sshll.u32 %s1304, 4
          %s1332 = int_to_ptr.vmem [resolvable:$true] %s1331
          %s1333 = sshll.u32 %s1330, 4
          %s1334 = int_to_ptr.hbm [resolvable:$true] %s1333
          %1339 = dma.vmem_to_hbm [thread:$0]  %s1332, 512, %s1334, %s1301, 128, 128, 8
        $region68: #{tpu_custom_call.1} parent=51 // pred_fallthru
          _
      $region52: #{tpu_custom_call.1} parent=5 // pred_fallthru
        _
      %p1340 = scmp.le.s32.totalorder 2, %s22
      // Predicated region
      $region69: #{tpu_custom_call.1} parent=5 // pred_check
        %p1341 = pneg %p1340
      $region70: #{tpu_custom_call.1} parent=5 // pred_check_branch
        %1343 = sbr.rel (%p1341) target = $region72
      $region71: #{tpu_custom_call.1} parent=5 // pred_region
        %s1344 = ssub.s32 %s22, 2
        // Predicated region
        $region73: #{tpu_custom_call.1} parent=71 // pred_check
          %p1345 = pneg %p252
        $region74: #{tpu_custom_call.1} parent=71 // pred_check_branch
          %1347 = sbr.rel (%p1345) target = $region76
        $region75: #{tpu_custom_call.1} parent=71 // pred_region
          %s1348 = sand.u32 %s237, 1
          %s1349 = scalar_lea.sflag [#allocation4], %s1348
          %s1350 = sand.u32 %s237, 1
          %s1351 = smul.addr %s1350, 8
          %s1352 = scalar_lea.vmem [#allocation3], %s1351
          %1354 = dma.done %s1349, 128
        $region76: #{tpu_custom_call.1} parent=71 // pred_fallthru
          _
        // Predicated region
        $region77: #{tpu_custom_call.1} parent=71 // pred_check
          %p1355 = pneg %p282
        $region78: #{tpu_custom_call.1} parent=71 // pred_check_branch
          %1357 = sbr.rel (%p1355) target = $region80
        $region79: #{tpu_custom_call.1} parent=71 // pred_region
          %s1358 = sand.u32 %s267, 1
          %s1359 = scalar_lea.sflag [#allocation6], %s1358
          %s1360 = sand.u32 %s267, 1
          %s1361 = smul.addr %s1360, 32
          %s1362 = scalar_lea.vmem [#allocation5], %s1361
          %1364 = dma.done %s1359, 512
        $region80: #{tpu_custom_call.1} parent=71 // pred_fallthru
          _
      $region72: #{tpu_custom_call.1} parent=5 // pred_fallthru
        _
    $region6: #{tpu_custom_call.1} parent=1 // loop_footer
      %s26 = sadd.s32 1, %s22
    $region7: #{tpu_custom_call.1} parent=1 // loop_footer_branch
      %21 = sbr.rel target = $region3
    $region8: #{tpu_custom_call.1} parent=1 // loop_exit
      _
    %1365 = vsyncpa [#allocation4], 1
    %s1366 = scalar_lea.sflag [#allocation4], 1
    %1367 = vsyncpa %s1366, 1
    %1368 = vsyncpa [#allocation6], 1
    %s1369 = scalar_lea.sflag [#allocation6], 1
    %1370 = vsyncpa %s1369, 1

</llo_original>
